<compile_context>
chip_gen: v7x
topology: tpu7x:2x2x1
jax: 0.10.0
libtpu: 0.0.40
codegen_flags: <defaults>
</compile_context>

<pallas_src>
import functools

import jax
import jax.numpy as jnp
from jax.experimental import pallas as pl
from jax.experimental.pallas import tpu as pltpu


# ----------------------------------------------------------------------------
# Fused kernel. Gate order follows PyTorch: [r, z, n].
# ----------------------------------------------------------------------------
def _fused_forward_kernel(x_ref, lbl_ref, packA_ref, packB_ref,
                          logits_ref, loss_ref, *, T, B, In, H, Ho, C):
    f32 = jnp.float32

    # ---- carve parameter views out of the two packed slabs (static slices) --
    packA = packA_ref[...]                        # (In + 2H + 3, 6H)
    w_ih_s = packA[0:In, :]                       # short GRU input proj, both dirs
    w_ih_l = packA[In:In + 2 * H, :]              # long GRU input proj, both dirs
    r0 = In + 2 * H
    b_ih_s = packA[r0:r0 + 1, :]                  # b_ih with b_hh(r,z) pre-folded
    b_ih_l = packA[r0 + 1:r0 + 2, :]
    bhn = packA[r0 + 2:r0 + 3, :]                 # packed b_hh_n per direction
    bhn_sf = bhn[:, 0:H]
    bhn_sb = bhn[:, H:2 * H]
    bhn_lf = bhn[:, 2 * H:2 * H + Ho]
    bhn_lb = bhn[:, 2 * H + Ho:2 * H + 2 * Ho]

    packB = packB_ref[...]                        # (2H + 2Ho + 2Ho + 1, 3H)
    whh_sf = packB[0:H, :]                        # (H, 3H), columns [r|z|n]
    whh_sb = packB[H:2 * H, :]
    whh_lf = packB[2 * H:2 * H + Ho, :]
    whh_lb = packB[2 * H + Ho:2 * H + 2 * Ho, :]
    r1 = 2 * H + 2 * Ho
    lin_w = packB[r1:r1 + 2 * Ho, :]              # (2Ho, 3H), zero-padded past C
    lin_b = packB[r1 + 2 * Ho:r1 + 2 * Ho + 1, :]

    # ---- GRU step: ONE fused (rows,hid)@(hid,3*hid) matmul per step ---------
    def gru_step(h, gi_r, gi_z, gi_n, whh, bhn_d, hid):
        hh = jnp.dot(h, whh, preferred_element_type=f32)          # (rows, 3*hid)
        r = jax.nn.sigmoid(gi_r + hh[:, 0:hid])                   # gi_r has b_hh_r
        z = jax.nn.sigmoid(gi_z + hh[:, hid:2 * hid])             # gi_z has b_hh_z
        n = jnp.tanh(gi_n + r * (hh[:, 2 * hid:3 * hid] + bhn_d))
        return n + z * (h - n)                                    # == (1-z)*n + z*h

    x2d = x_ref[...]                              # (T*B, In), row = t*B + b
    mid = T // 2

    # -------- short bi-GRU: one 6H-wide input projection for both directions.
    gi_s = jnp.dot(x2d, w_ih_s, preferred_element_type=f32) + b_ih_s   # (T*B, 6H)

    # TODO(synk): static unroll is right at T=8/B=2; switch to lax.fori_loop or
    # a sequential grid axis if T/B grow beyond toy sizes (vreg pressure).
    h_f = jnp.zeros((B, H), f32)
    for t in range(mid + 1):                      # forward: t = 0 .. mid
        g = gi_s[t * B:(t + 1) * B, :]
        h_f = gru_step(h_f, g[:, 0:H], g[:, H:2 * H], g[:, 2 * H:3 * H],
                       whh_sf, bhn_sf, H)

    h_b = jnp.zeros((B, H), f32)
    for t in range(T - 1, mid - 1, -1):           # backward: t = T-1 .. mid
        g = gi_s[t * B:(t + 1) * B, :]
        h_b = gru_step(h_b, g[:, 3 * H:4 * H], g[:, 4 * H:5 * H], g[:, 5 * H:6 * H],
                       whh_sb, bhn_sb, H)

    hmid = jnp.concatenate([h_f, h_b], axis=-1)   # == short_result[:, T//2, :]

    # -------- long bi-GRU over the length-B "sequence" (batch_first quirk of
    # the reference: (1, B, 2H) with batch_first => batch 1, seq len B).
    gi_l = jnp.dot(hmid, w_ih_l, preferred_element_type=f32) + b_ih_l  # (B, 6Ho)

    h = jnp.zeros((1, Ho), f32)
    outs_f = []
    for s in range(B):
        g = gi_l[s:s + 1, :]
        h = gru_step(h, g[:, 0:Ho], g[:, Ho:2 * Ho], g[:, 2 * Ho:3 * Ho],
                     whh_lf, bhn_lf, Ho)
        outs_f.append(h)

    h = jnp.zeros((1, Ho), f32)
    outs_b = [None] * B
    for s in range(B - 1, -1, -1):
        g = gi_l[s:s + 1, :]
        h = gru_step(h, g[:, 3 * Ho:4 * Ho], g[:, 4 * Ho:5 * Ho], g[:, 5 * Ho:6 * Ho],
                     whh_lb, bhn_lb, Ho)
        outs_b[s] = h

    long_out = jnp.concatenate(
        [jnp.concatenate(outs_f, axis=0), jnp.concatenate(outs_b, axis=0)],
        axis=-1)                                                    # (B, 2Ho)

    # -------- Linear (lane-padded weights) + stable cross-entropy (mean NLL).
    padded = jnp.dot(long_out, lin_w, preferred_element_type=f32) + lin_b
    logits = padded[:, 0:C]                                         # (B, C)
    logits_ref[...] = logits

    lane_c = jax.lax.broadcasted_iota(jnp.int32, (1, C), 1)
    nll_sum = jnp.zeros((1, 1), f32)
    for b in range(B):
        row = logits[b:b + 1, :]
        m = jnp.max(row, axis=-1, keepdims=True)
        lse = jnp.log(jnp.sum(jnp.exp(row - m), axis=-1, keepdims=True)) + m
        picked = jnp.sum(jnp.where(lane_c == lbl_ref[b], row, 0.0),
                         axis=-1, keepdims=True)
        nll_sum = nll_sum + (lse - picked)
    loss_ref[...] = nll_sum * (1.0 / B)


# ----------------------------------------------------------------------------
# Wrapper: one gridless pallas_call, whole problem resident in VMEM.
# ----------------------------------------------------------------------------
def mr_dakgnn_forward(packed, x, label, *, higru_hid, higru_out, num_classes=5):
    B, T, In = x.shape
    H, Ho, C = higru_hid, higru_out, num_classes
    # Tiny layout prep: time-major 2-D slab so per-timestep row blocks are
    # contiguous, enabling the single hoisted input projection.
    x_tm2d = jnp.transpose(x, (1, 0, 2)).reshape(T * B, In)
    lbl = label.astype(jnp.int32)

    kernel = functools.partial(_fused_forward_kernel,
                               T=T, B=B, In=In, H=H, Ho=Ho, C=C)
    flops = 2 * (T * B * In * 6 * H            # short input projection
                 + B * 2 * H * 6 * Ho          # long input projection
                 + (T + 1) * B * H * 3 * H     # short recurrences (fwd+bwd)
                 + 2 * B * Ho * 3 * Ho         # long recurrences (fwd+bwd)
                 + B * 2 * Ho * 3 * H)         # linear (padded lanes)
    bytes_acc = (x_tm2d.size + packed["packA"].size + packed["packB"].size
                 + B * C + 1) * 4 + B * 4

    logits, loss = pl.pallas_call(
        kernel,
        out_shape=(jax.ShapeDtypeStruct((B, C), jnp.float32),
                   jax.ShapeDtypeStruct((1, 1), jnp.float32)),
        in_specs=[
            pl.BlockSpec(memory_space=pltpu.MemorySpace.VMEM),   # x (time-major)
            pl.BlockSpec(memory_space=pltpu.MemorySpace.SMEM),   # labels (scalars)
            pl.BlockSpec(memory_space=pltpu.MemorySpace.VMEM),   # packA
            pl.BlockSpec(memory_space=pltpu.MemorySpace.VMEM),   # packB
        ],
        out_specs=(pl.BlockSpec(memory_space=pltpu.MemorySpace.VMEM),
                   pl.BlockSpec(memory_space=pltpu.MemorySpace.VMEM)),
        cost_estimate=pl.CostEstimate(flops=int(flops),
                                      transcendentals=int(3 * (T + 2) * B * H + B * C),
                                      bytes_accessed=int(bytes_acc)),
    )(x_tm2d, lbl, packed["packA"], packed["packB"])
    return logits, loss[0, 0]


# ----------------------------------------------------------------------------
# Parameter construction: PyTorch-style uniform(-1/sqrt(hid), 1/sqrt(hid)) init,
# pre-packed ONCE into two flat slabs (4 kernel DMAs instead of ~20).
#   packA (In+2H+3, 6H): [short W_ih | long W_ih | short b_ih | long b_ih | b_hh_n]
#   packB (2H+2Ho+2Ho+1, 3H): [W_hh short f/b, long f/b | padded lin W | padded lin b]
# ----------------------------------------------------------------------------
def init_packed_params(key, in_feat, H, Ho, C):
    assert H == Ho, "packed layout below assumes equal short/long hidden sizes"

    def gru_dir(key, input_size, hidden):
        k = 1.0 / jnp.sqrt(jnp.float32(hidden))
        ks = jax.random.split(key, 4)
        u = lambda kk, s: jax.random.uniform(kk, s, jnp.float32, -k, k)
        # gate column order: [r | z | n]
        return (u(ks[0], (input_size, 3 * hidden)),   # w_ih
                u(ks[1], (hidden, 3 * hidden)),       # w_hh
                u(ks[2], (1, 3 * hidden)),            # b_ih
                u(ks[3], (1, 3 * hidden)))            # b_hh

    kS, kL, kLin = jax.random.split(key, 3)
    kSf, kSb = jax.random.split(kS)
    kLf, kLb = jax.random.split(kL)
    s_f, s_b = gru_dir(kSf, in_feat, H), gru_dir(kSb, in_feat, H)
    l_f, l_b = gru_dir(kLf, 2 * H, Ho), gru_dir(kLb, 2 * H, Ho)

    def fuse(f, b, hid):
        w_ih_f, w_hh_f, b_ih_f, b_hh_f = f
        w_ih_b, w_hh_b, b_ih_b, b_hh_b = b
        w_ih = jnp.concatenate([w_ih_f, w_ih_b], axis=1)   # [f_r f_z f_n b_r b_z b_n]

        def fold(bi, bh):   # fold b_hh into b_ih for r,z only (n stays separate)
            return jnp.concatenate([bi[:, :2 * hid] + bh[:, :2 * hid],
                                    bi[:, 2 * hid:]], axis=1)

        b_ih = jnp.concatenate([fold(b_ih_f, b_hh_f), fold(b_ih_b, b_hh_b)], axis=1)
        bhn = jnp.concatenate([b_hh_f[:, 2 * hid:], b_hh_b[:, 2 * hid:]], axis=1)
        return w_ih, b_ih, bhn, w_hh_f, w_hh_b

    s_wih, s_bih, s_bhn, s_whf, s_whb = fuse(s_f, s_b, H)
    l_wih, l_bih, l_bhn, l_whf, l_whb = fuse(l_f, l_b, Ho)

    klw, klb = jax.random.split(kLin)
    kk = 1.0 / jnp.sqrt(jnp.float32(2 * Ho))
    lin_w = jax.random.uniform(klw, (2 * Ho, C), jnp.float32, -kk, kk)
    lin_b = jax.random.uniform(klb, (1, C), jnp.float32, -kk, kk)

    bhn_row = jnp.zeros((1, 6 * H), jnp.float32)
    bhn_row = bhn_row.at[:, 0:2 * H].set(s_bhn)
    bhn_row = bhn_row.at[:, 2 * H:2 * H + 2 * Ho].set(l_bhn)
    packA = jnp.concatenate([s_wih, l_wih, s_bih, l_bih, bhn_row], axis=0)

    lin_w_pad = jnp.zeros((2 * Ho, 3 * H), jnp.float32).at[:, 0:C].set(lin_w)
    lin_b_pad = jnp.zeros((1, 3 * H), jnp.float32).at[:, 0:C].set(lin_b)
    packB = jnp.concatenate([s_whf, s_whb, l_whf, l_whb, lin_w_pad, lin_b_pad],
                            axis=0)
    return {"packA": packA, "packB": packB}


if __name__ == "__main__":
    # Module hyper-params (only out_dim*num_of_nodes, higru_hid, higru_out used)
    out_dim, num_of_nodes = 4, 4
    in_feat = out_dim * num_of_nodes   # 16
    higru_hid = 16
    higru_out = 16
    num_classes = 5
    batch, seq = 2, 8

    root = jax.random.PRNGKey(0)
    k_p, k_x, k_lbl = jax.random.split(root, 3)

    packed = init_packed_params(k_p, in_feat, higru_hid, higru_out, num_classes)
    x = jax.random.normal(k_x, (batch, seq, in_feat), jnp.float32)
    label = jax.random.randint(k_lbl, (batch,), 0, num_classes, jnp.int32)

    fwd = jax.jit(functools.partial(mr_dakgnn_forward,
                                    higru_hid=higru_hid,
                                    higru_out=higru_out,
                                    num_classes=num_classes))
    logits, loss = fwd(packed, x, label)
    jax.block_until_ready((logits, loss))

    assert logits.shape == (batch, num_classes)
    assert loss.shape == ()
    assert bool(jnp.isfinite(loss))
    assert bool(jnp.all(jnp.isfinite(logits)))
    print("KERNEL_OK")
</pallas_src>

<mosaic_0001>
module attributes {stable_mosaic.version = 11 : i64} {
  func.func @_fused_forward_kernel(%arg0: memref<16x16xf32, #tpu.memory_space<vmem>>, %arg1: memref<2xi32, #tpu.memory_space<smem>>, %arg2: memref<51x96xf32, #tpu.memory_space<vmem>>, %arg3: memref<97x48xf32, #tpu.memory_space<vmem>>, %arg4: memref<2x5xf32, #tpu.memory_space<vmem>>, %arg5: memref<1x1xf32, #tpu.memory_space<vmem>>) attributes {dimension_semantics = [], scalar_prefetch = 0 : i64, scratch_operands = 0 : i64, tpu.core_type = #tpu.core_type<tc>} {
    %c0 = arith.constant 0 : index
    %c0_0 = arith.constant 0 : index
    %0 = vector.load %arg2[%c0, %c0_0] : memref<51x96xf32, #tpu.memory_space<vmem>>, vector<51x96xf32>
    %1 = vector.extract_strided_slice %0 {offsets = [0, 0], sizes = [16, 96], strides = [1, 1]} : vector<51x96xf32> to vector<16x96xf32>
    %2 = vector.extract_strided_slice %0 {offsets = [16, 0], sizes = [32, 96], strides = [1, 1]} : vector<51x96xf32> to vector<32x96xf32>
    %3 = vector.extract_strided_slice %0 {offsets = [48, 0], sizes = [1, 96], strides = [1, 1]} : vector<51x96xf32> to vector<1x96xf32>
    %4 = vector.extract_strided_slice %0 {offsets = [49, 0], sizes = [1, 96], strides = [1, 1]} : vector<51x96xf32> to vector<1x96xf32>
    %5 = vector.extract_strided_slice %0 {offsets = [50, 0], sizes = [1, 96], strides = [1, 1]} : vector<51x96xf32> to vector<1x96xf32>
    %6 = vector.extract_strided_slice %5 {offsets = [0, 0], sizes = [1, 16], strides = [1, 1]} : vector<1x96xf32> to vector<1x16xf32>
    %7 = vector.extract_strided_slice %5 {offsets = [0, 16], sizes = [1, 16], strides = [1, 1]} : vector<1x96xf32> to vector<1x16xf32>
    %8 = vector.extract_strided_slice %5 {offsets = [0, 32], sizes = [1, 16], strides = [1, 1]} : vector<1x96xf32> to vector<1x16xf32>
    %9 = vector.extract_strided_slice %5 {offsets = [0, 48], sizes = [1, 16], strides = [1, 1]} : vector<1x96xf32> to vector<1x16xf32>
    %c0_1 = arith.constant 0 : index
    %c0_2 = arith.constant 0 : index
    %10 = vector.load %arg3[%c0_1, %c0_2] : memref<97x48xf32, #tpu.memory_space<vmem>>, vector<97x48xf32>
    %11 = vector.extract_strided_slice %10 {offsets = [0, 0], sizes = [16, 48], strides = [1, 1]} : vector<97x48xf32> to vector<16x48xf32>
    %12 = vector.extract_strided_slice %10 {offsets = [16, 0], sizes = [16, 48], strides = [1, 1]} : vector<97x48xf32> to vector<16x48xf32>
    %13 = vector.extract_strided_slice %10 {offsets = [32, 0], sizes = [16, 48], strides = [1, 1]} : vector<97x48xf32> to vector<16x48xf32>
    %14 = vector.extract_strided_slice %10 {offsets = [48, 0], sizes = [16, 48], strides = [1, 1]} : vector<97x48xf32> to vector<16x48xf32>
    %15 = vector.extract_strided_slice %10 {offsets = [64, 0], sizes = [32, 48], strides = [1, 1]} : vector<97x48xf32> to vector<32x48xf32>
    %16 = vector.extract_strided_slice %10 {offsets = [96, 0], sizes = [1, 48], strides = [1, 1]} : vector<97x48xf32> to vector<1x48xf32>
    %c0_3 = arith.constant 0 : index
    %c0_4 = arith.constant 0 : index
    %17 = vector.load %arg0[%c0_3, %c0_4] : memref<16x16xf32, #tpu.memory_space<vmem>>, vector<16x16xf32>
    %cst = arith.constant dense<0.000000e+00> : vector<16x96xf32>
    %18 = tpu.matmul %17, %1, %cst {dimension_numbers = #tpu.dot_dimension_numbers<[1], [0], [0], [1], [0, 0, 1, 1], [], []>} : vector<16x16xf32>, vector<16x96xf32>, vector<16x96xf32> -> vector<16x96xf32>
    %19 = vector.broadcast %3 : vector<1x96xf32> to vector<16x96xf32>
    %20 = arith.addf %18, %19 : vector<16x96xf32>
    %cst_5 = arith.constant 0.000000e+00 : f32
    %21 = vector.broadcast %cst_5 : f32 to vector<2x16xf32>
    %22 = vector.extract_strided_slice %20 {offsets = [0, 0], sizes = [2, 96], strides = [1, 1]} : vector<16x96xf32> to vector<2x96xf32>
    %23 = vector.extract_strided_slice %22 {offsets = [0, 0], sizes = [2, 16], strides = [1, 1]} : vector<2x96xf32> to vector<2x16xf32>
    %24 = vector.extract_strided_slice %22 {offsets = [0, 16], sizes = [2, 16], strides = [1, 1]} : vector<2x96xf32> to vector<2x16xf32>
    %25 = vector.extract_strided_slice %22 {offsets = [0, 32], sizes = [2, 16], strides = [1, 1]} : vector<2x96xf32> to vector<2x16xf32>
    %cst_6 = arith.constant dense<0.000000e+00> : vector<2x48xf32>
    %26 = tpu.matmul %21, %11, %cst_6 {dimension_numbers = #tpu.dot_dimension_numbers<[1], [0], [0], [1], [0, 0, 1, 1], [], []>} : vector<2x16xf32>, vector<16x48xf32>, vector<2x48xf32> -> vector<2x48xf32>
    %27 = vector.extract_strided_slice %26 {offsets = [0, 0], sizes = [2, 16], strides = [1, 1]} : vector<2x48xf32> to vector<2x16xf32>
    %28 = arith.addf %23, %27 : vector<2x16xf32>
    %29 = arith.negf %28 : vector<2x16xf32>
    %30 = math.exp %29 : vector<2x16xf32>
    %cst_7 = arith.constant 1.000000e+00 : f32
    %31 = vector.broadcast %cst_7 : f32 to vector<2x16xf32>
    %32 = arith.addf %31, %30 : vector<2x16xf32>
    %33 = arith.divf %31, %32 : vector<2x16xf32>
    %34 = vector.extract_strided_slice %26 {offsets = [0, 16], sizes = [2, 16], strides = [1, 1]} : vector<2x48xf32> to vector<2x16xf32>
    %35 = arith.addf %24, %34 : vector<2x16xf32>
    %36 = arith.negf %35 : vector<2x16xf32>
    %37 = math.exp %36 : vector<2x16xf32>
    %cst_8 = arith.constant 1.000000e+00 : f32
    %38 = vector.broadcast %cst_8 : f32 to vector<2x16xf32>
    %39 = arith.addf %38, %37 : vector<2x16xf32>
    %40 = arith.divf %38, %39 : vector<2x16xf32>
    %41 = vector.extract_strided_slice %26 {offsets = [0, 32], sizes = [2, 16], strides = [1, 1]} : vector<2x48xf32> to vector<2x16xf32>
    %42 = vector.broadcast %6 : vector<1x16xf32> to vector<2x16xf32>
    %43 = arith.addf %41, %42 : vector<2x16xf32>
    %44 = arith.mulf %33, %43 : vector<2x16xf32>
    %45 = arith.addf %25, %44 : vector<2x16xf32>
    %46 = math.tanh %45 : vector<2x16xf32>
    %47 = arith.subf %21, %46 : vector<2x16xf32>
    %48 = arith.mulf %40, %47 : vector<2x16xf32>
    %49 = arith.addf %46, %48 : vector<2x16xf32>
    %50 = vector.extract_strided_slice %20 {offsets = [2, 0], sizes = [2, 96], strides = [1, 1]} : vector<16x96xf32> to vector<2x96xf32>
    %51 = vector.extract_strided_slice %50 {offsets = [0, 0], sizes = [2, 16], strides = [1, 1]} : vector<2x96xf32> to vector<2x16xf32>
    %52 = vector.extract_strided_slice %50 {offsets = [0, 16], sizes = [2, 16], strides = [1, 1]} : vector<2x96xf32> to vector<2x16xf32>
    %53 = vector.extract_strided_slice %50 {offsets = [0, 32], sizes = [2, 16], strides = [1, 1]} : vector<2x96xf32> to vector<2x16xf32>
    %cst_9 = arith.constant dense<0.000000e+00> : vector<2x48xf32>
    %54 = tpu.matmul %49, %11, %cst_9 {dimension_numbers = #tpu.dot_dimension_numbers<[1], [0], [0], [1], [0, 0, 1, 1], [], []>} : vector<2x16xf32>, vector<16x48xf32>, vector<2x48xf32> -> vector<2x48xf32>
    %55 = vector.extract_strided_slice %54 {offsets = [0, 0], sizes = [2, 16], strides = [1, 1]} : vector<2x48xf32> to vector<2x16xf32>
    %56 = arith.addf %51, %55 : vector<2x16xf32>
    %57 = arith.negf %56 : vector<2x16xf32>
    %58 = math.exp %57 : vector<2x16xf32>
    %cst_10 = arith.constant 1.000000e+00 : f32
    %59 = vector.broadcast %cst_10 : f32 to vector<2x16xf32>
    %60 = arith.addf %59, %58 : vector<2x16xf32>
    %61 = arith.divf %59, %60 : vector<2x16xf32>
    %62 = vector.extract_strided_slice %54 {offsets = [0, 16], sizes = [2, 16], strides = [1, 1]} : vector<2x48xf32> to vector<2x16xf32>
    %63 = arith.addf %52, %62 : vector<2x16xf32>
    %64 = arith.negf %63 : vector<2x16xf32>
    %65 = math.exp %64 : vector<2x16xf32>
    %cst_11 = arith.constant 1.000000e+00 : f32
    %66 = vector.broadcast %cst_11 : f32 to vector<2x16xf32>
    %67 = arith.addf %66, %65 : vector<2x16xf32>
    %68 = arith.divf %66, %67 : vector<2x16xf32>
    %69 = vector.extract_strided_slice %54 {offsets = [0, 32], sizes = [2, 16], strides = [1, 1]} : vector<2x48xf32> to vector<2x16xf32>
    %70 = vector.broadcast %6 : vector<1x16xf32> to vector<2x16xf32>
    %71 = arith.addf %69, %70 : vector<2x16xf32>
    %72 = arith.mulf %61, %71 : vector<2x16xf32>
    %73 = arith.addf %53, %72 : vector<2x16xf32>
    %74 = math.tanh %73 : vector<2x16xf32>
    %75 = arith.subf %49, %74 : vector<2x16xf32>
    %76 = arith.mulf %68, %75 : vector<2x16xf32>
    %77 = arith.addf %74, %76 : vector<2x16xf32>
    %78 = vector.extract_strided_slice %20 {offsets = [4, 0], sizes = [2, 96], strides = [1, 1]} : vector<16x96xf32> to vector<2x96xf32>
    %79 = vector.extract_strided_slice %78 {offsets = [0, 0], sizes = [2, 16], strides = [1, 1]} : vector<2x96xf32> to vector<2x16xf32>
    %80 = vector.extract_strided_slice %78 {offsets = [0, 16], sizes = [2, 16], strides = [1, 1]} : vector<2x96xf32> to vector<2x16xf32>
    %81 = vector.extract_strided_slice %78 {offsets = [0, 32], sizes = [2, 16], strides = [1, 1]} : vector<2x96xf32> to vector<2x16xf32>
    %cst_12 = arith.constant dense<0.000000e+00> : vector<2x48xf32>
    %82 = tpu.matmul %77, %11, %cst_12 {dimension_numbers = #tpu.dot_dimension_numbers<[1], [0], [0], [1], [0, 0, 1, 1], [], []>} : vector<2x16xf32>, vector<16x48xf32>, vector<2x48xf32> -> vector<2x48xf32>
    %83 = vector.extract_strided_slice %82 {offsets = [0, 0], sizes = [2, 16], strides = [1, 1]} : vector<2x48xf32> to vector<2x16xf32>
    %84 = arith.addf %79, %83 : vector<2x16xf32>
    %85 = arith.negf %84 : vector<2x16xf32>
    %86 = math.exp %85 : vector<2x16xf32>
    %cst_13 = arith.constant 1.000000e+00 : f32
    %87 = vector.broadcast %cst_13 : f32 to vector<2x16xf32>
    %88 = arith.addf %87, %86 : vector<2x16xf32>
    %89 = arith.divf %87, %88 : vector<2x16xf32>
    %90 = vector.extract_strided_slice %82 {offsets = [0, 16], sizes = [2, 16], strides = [1, 1]} : vector<2x48xf32> to vector<2x16xf32>
    %91 = arith.addf %80, %90 : vector<2x16xf32>
    %92 = arith.negf %91 : vector<2x16xf32>
    %93 = math.exp %92 : vector<2x16xf32>
    %cst_14 = arith.constant 1.000000e+00 : f32
    %94 = vector.broadcast %cst_14 : f32 to vector<2x16xf32>
    %95 = arith.addf %94, %93 : vector<2x16xf32>
    %96 = arith.divf %94, %95 : vector<2x16xf32>
    %97 = vector.extract_strided_slice %82 {offsets = [0, 32], sizes = [2, 16], strides = [1, 1]} : vector<2x48xf32> to vector<2x16xf32>
    %98 = vector.broadcast %6 : vector<1x16xf32> to vector<2x16xf32>
    %99 = arith.addf %97, %98 : vector<2x16xf32>
    %100 = arith.mulf %89, %99 : vector<2x16xf32>
    %101 = arith.addf %81, %100 : vector<2x16xf32>
    %102 = math.tanh %101 : vector<2x16xf32>
    %103 = arith.subf %77, %102 : vector<2x16xf32>
    %104 = arith.mulf %96, %103 : vector<2x16xf32>
    %105 = arith.addf %102, %104 : vector<2x16xf32>
    %106 = vector.extract_strided_slice %20 {offsets = [6, 0], sizes = [2, 96], strides = [1, 1]} : vector<16x96xf32> to vector<2x96xf32>
    %107 = vector.extract_strided_slice %106 {offsets = [0, 0], sizes = [2, 16], strides = [1, 1]} : vector<2x96xf32> to vector<2x16xf32>
    %108 = vector.extract_strided_slice %106 {offsets = [0, 16], sizes = [2, 16], strides = [1, 1]} : vector<2x96xf32> to vector<2x16xf32>
    %109 = vector.extract_strided_slice %106 {offsets = [0, 32], sizes = [2, 16], strides = [1, 1]} : vector<2x96xf32> to vector<2x16xf32>
    %cst_15 = arith.constant dense<0.000000e+00> : vector<2x48xf32>
    %110 = tpu.matmul %105, %11, %cst_15 {dimension_numbers = #tpu.dot_dimension_numbers<[1], [0], [0], [1], [0, 0, 1, 1], [], []>} : vector<2x16xf32>, vector<16x48xf32>, vector<2x48xf32> -> vector<2x48xf32>
    %111 = vector.extract_strided_slice %110 {offsets = [0, 0], sizes = [2, 16], strides = [1, 1]} : vector<2x48xf32> to vector<2x16xf32>
    %112 = arith.addf %107, %111 : vector<2x16xf32>
    %113 = arith.negf %112 : vector<2x16xf32>
    %114 = math.exp %113 : vector<2x16xf32>
    %cst_16 = arith.constant 1.000000e+00 : f32
    %115 = vector.broadcast %cst_16 : f32 to vector<2x16xf32>
    %116 = arith.addf %115, %114 : vector<2x16xf32>
    %117 = arith.divf %115, %116 : vector<2x16xf32>
    %118 = vector.extract_strided_slice %110 {offsets = [0, 16], sizes = [2, 16], strides = [1, 1]} : vector<2x48xf32> to vector<2x16xf32>
    %119 = arith.addf %108, %118 : vector<2x16xf32>
    %120 = arith.negf %119 : vector<2x16xf32>
    %121 = math.exp %120 : vector<2x16xf32>
    %cst_17 = arith.constant 1.000000e+00 : f32
    %122 = vector.broadcast %cst_17 : f32 to vector<2x16xf32>
    %123 = arith.addf %122, %121 : vector<2x16xf32>
    %124 = arith.divf %122, %123 : vector<2x16xf32>
    %125 = vector.extract_strided_slice %110 {offsets = [0, 32], sizes = [2, 16], strides = [1, 1]} : vector<2x48xf32> to vector<2x16xf32>
    %126 = vector.broadcast %6 : vector<1x16xf32> to vector<2x16xf32>
    %127 = arith.addf %125, %126 : vector<2x16xf32>
    %128 = arith.mulf %117, %127 : vector<2x16xf32>
    %129 = arith.addf %109, %128 : vector<2x16xf32>
    %130 = math.tanh %129 : vector<2x16xf32>
    %131 = arith.subf %105, %130 : vector<2x16xf32>
    %132 = arith.mulf %124, %131 : vector<2x16xf32>
    %133 = arith.addf %130, %132 : vector<2x16xf32>
    %134 = vector.extract_strided_slice %20 {offsets = [8, 0], sizes = [2, 96], strides = [1, 1]} : vector<16x96xf32> to vector<2x96xf32>
    %135 = vector.extract_strided_slice %134 {offsets = [0, 0], sizes = [2, 16], strides = [1, 1]} : vector<2x96xf32> to vector<2x16xf32>
    %136 = vector.extract_strided_slice %134 {offsets = [0, 16], sizes = [2, 16], strides = [1, 1]} : vector<2x96xf32> to vector<2x16xf32>
    %137 = vector.extract_strided_slice %134 {offsets = [0, 32], sizes = [2, 16], strides = [1, 1]} : vector<2x96xf32> to vector<2x16xf32>
    %cst_18 = arith.constant dense<0.000000e+00> : vector<2x48xf32>
    %138 = tpu.matmul %133, %11, %cst_18 {dimension_numbers = #tpu.dot_dimension_numbers<[1], [0], [0], [1], [0, 0, 1, 1], [], []>} : vector<2x16xf32>, vector<16x48xf32>, vector<2x48xf32> -> vector<2x48xf32>
    %139 = vector.extract_strided_slice %138 {offsets = [0, 0], sizes = [2, 16], strides = [1, 1]} : vector<2x48xf32> to vector<2x16xf32>
    %140 = arith.addf %135, %139 : vector<2x16xf32>
    %141 = arith.negf %140 : vector<2x16xf32>
    %142 = math.exp %141 : vector<2x16xf32>
    %cst_19 = arith.constant 1.000000e+00 : f32
    %143 = vector.broadcast %cst_19 : f32 to vector<2x16xf32>
    %144 = arith.addf %143, %142 : vector<2x16xf32>
    %145 = arith.divf %143, %144 : vector<2x16xf32>
    %146 = vector.extract_strided_slice %138 {offsets = [0, 16], sizes = [2, 16], strides = [1, 1]} : vector<2x48xf32> to vector<2x16xf32>
    %147 = arith.addf %136, %146 : vector<2x16xf32>
    %148 = arith.negf %147 : vector<2x16xf32>
    %149 = math.exp %148 : vector<2x16xf32>
    %cst_20 = arith.constant 1.000000e+00 : f32
    %150 = vector.broadcast %cst_20 : f32 to vector<2x16xf32>
    %151 = arith.addf %150, %149 : vector<2x16xf32>
    %152 = arith.divf %150, %151 : vector<2x16xf32>
    %153 = vector.extract_strided_slice %138 {offsets = [0, 32], sizes = [2, 16], strides = [1, 1]} : vector<2x48xf32> to vector<2x16xf32>
    %154 = vector.broadcast %6 : vector<1x16xf32> to vector<2x16xf32>
    %155 = arith.addf %153, %154 : vector<2x16xf32>
    %156 = arith.mulf %145, %155 : vector<2x16xf32>
    %157 = arith.addf %137, %156 : vector<2x16xf32>
    %158 = math.tanh %157 : vector<2x16xf32>
    %159 = arith.subf %133, %158 : vector<2x16xf32>
    %160 = arith.mulf %152, %159 : vector<2x16xf32>
    %161 = arith.addf %158, %160 : vector<2x16xf32>
    %cst_21 = arith.constant 0.000000e+00 : f32
    %162 = vector.broadcast %cst_21 : f32 to vector<2x16xf32>
    %163 = vector.extract_strided_slice %20 {offsets = [14, 0], sizes = [2, 96], strides = [1, 1]} : vector<16x96xf32> to vector<2x96xf32>
    %164 = vector.extract_strided_slice %163 {offsets = [0, 48], sizes = [2, 16], strides = [1, 1]} : vector<2x96xf32> to vector<2x16xf32>
    %165 = vector.extract_strided_slice %163 {offsets = [0, 64], sizes = [2, 16], strides = [1, 1]} : vector<2x96xf32> to vector<2x16xf32>
    %166 = vector.extract_strided_slice %163 {offsets = [0, 80], sizes = [2, 16], strides = [1, 1]} : vector<2x96xf32> to vector<2x16xf32>
    %cst_22 = arith.constant dense<0.000000e+00> : vector<2x48xf32>
    %167 = tpu.matmul %162, %12, %cst_22 {dimension_numbers = #tpu.dot_dimension_numbers<[1], [0], [0], [1], [0, 0, 1, 1], [], []>} : vector<2x16xf32>, vector<16x48xf32>, vector<2x48xf32> -> vector<2x48xf32>
    %168 = vector.extract_strided_slice %167 {offsets = [0, 0], sizes = [2, 16], strides = [1, 1]} : vector<2x48xf32> to vector<2x16xf32>
    %169 = arith.addf %164, %168 : vector<2x16xf32>
    %170 = arith.negf %169 : vector<2x16xf32>
    %171 = math.exp %170 : vector<2x16xf32>
    %cst_23 = arith.constant 1.000000e+00 : f32
    %172 = vector.broadcast %cst_23 : f32 to vector<2x16xf32>
    %173 = arith.addf %172, %171 : vector<2x16xf32>
    %174 = arith.divf %172, %173 : vector<2x16xf32>
    %175 = vector.extract_strided_slice %167 {offsets = [0, 16], sizes = [2, 16], strides = [1, 1]} : vector<2x48xf32> to vector<2x16xf32>
    %176 = arith.addf %165, %175 : vector<2x16xf32>
    %177 = arith.negf %176 : vector<2x16xf32>
    %178 = math.exp %177 : vector<2x16xf32>
    %cst_24 = arith.constant 1.000000e+00 : f32
    %179 = vector.broadcast %cst_24 : f32 to vector<2x16xf32>
    %180 = arith.addf %179, %178 : vector<2x16xf32>
    %181 = arith.divf %179, %180 : vector<2x16xf32>
    %182 = vector.extract_strided_slice %167 {offsets = [0, 32], sizes = [2, 16], strides = [1, 1]} : vector<2x48xf32> to vector<2x16xf32>
    %183 = vector.broadcast %7 : vector<1x16xf32> to vector<2x16xf32>
    %184 = arith.addf %182, %183 : vector<2x16xf32>
    %185 = arith.mulf %174, %184 : vector<2x16xf32>
    %186 = arith.addf %166, %185 : vector<2x16xf32>
    %187 = math.tanh %186 : vector<2x16xf32>
    %188 = arith.subf %162, %187 : vector<2x16xf32>
    %189 = arith.mulf %181, %188 : vector<2x16xf32>
    %190 = arith.addf %187, %189 : vector<2x16xf32>
    %191 = vector.extract_strided_slice %20 {offsets = [12, 0], sizes = [2, 96], strides = [1, 1]} : vector<16x96xf32> to vector<2x96xf32>
    %192 = vector.extract_strided_slice %191 {offsets = [0, 48], sizes = [2, 16], strides = [1, 1]} : vector<2x96xf32> to vector<2x16xf32>
    %193 = vector.extract_strided_slice %191 {offsets = [0, 64], sizes = [2, 16], strides = [1, 1]} : vector<2x96xf32> to vector<2x16xf32>
    %194 = vector.extract_strided_slice %191 {offsets = [0, 80], sizes = [2, 16], strides = [1, 1]} : vector<2x96xf32> to vector<2x16xf32>
    %cst_25 = arith.constant dense<0.000000e+00> : vector<2x48xf32>
    %195 = tpu.matmul %190, %12, %cst_25 {dimension_numbers = #tpu.dot_dimension_numbers<[1], [0], [0], [1], [0, 0, 1, 1], [], []>} : vector<2x16xf32>, vector<16x48xf32>, vector<2x48xf32> -> vector<2x48xf32>
    %196 = vector.extract_strided_slice %195 {offsets = [0, 0], sizes = [2, 16], strides = [1, 1]} : vector<2x48xf32> to vector<2x16xf32>
    %197 = arith.addf %192, %196 : vector<2x16xf32>
    %198 = arith.negf %197 : vector<2x16xf32>
    %199 = math.exp %198 : vector<2x16xf32>
    %cst_26 = arith.constant 1.000000e+00 : f32
    %200 = vector.broadcast %cst_26 : f32 to vector<2x16xf32>
    %201 = arith.addf %200, %199 : vector<2x16xf32>
    %202 = arith.divf %200, %201 : vector<2x16xf32>
    %203 = vector.extract_strided_slice %195 {offsets = [0, 16], sizes = [2, 16], strides = [1, 1]} : vector<2x48xf32> to vector<2x16xf32>
    %204 = arith.addf %193, %203 : vector<2x16xf32>
    %205 = arith.negf %204 : vector<2x16xf32>
    %206 = math.exp %205 : vector<2x16xf32>
    %cst_27 = arith.constant 1.000000e+00 : f32
    %207 = vector.broadcast %cst_27 : f32 to vector<2x16xf32>
    %208 = arith.addf %207, %206 : vector<2x16xf32>
    %209 = arith.divf %207, %208 : vector<2x16xf32>
    %210 = vector.extract_strided_slice %195 {offsets = [0, 32], sizes = [2, 16], strides = [1, 1]} : vector<2x48xf32> to vector<2x16xf32>
    %211 = vector.broadcast %7 : vector<1x16xf32> to vector<2x16xf32>
    %212 = arith.addf %210, %211 : vector<2x16xf32>
    %213 = arith.mulf %202, %212 : vector<2x16xf32>
    %214 = arith.addf %194, %213 : vector<2x16xf32>
    %215 = math.tanh %214 : vector<2x16xf32>
    %216 = arith.subf %190, %215 : vector<2x16xf32>
    %217 = arith.mulf %209, %216 : vector<2x16xf32>
    %218 = arith.addf %215, %217 : vector<2x16xf32>
    %219 = vector.extract_strided_slice %20 {offsets = [10, 0], sizes = [2, 96], strides = [1, 1]} : vector<16x96xf32> to vector<2x96xf32>
    %220 = vector.extract_strided_slice %219 {offsets = [0, 48], sizes = [2, 16], strides = [1, 1]} : vector<2x96xf32> to vector<2x16xf32>
    %221 = vector.extract_strided_slice %219 {offsets = [0, 64], sizes = [2, 16], strides = [1, 1]} : vector<2x96xf32> to vector<2x16xf32>
    %222 = vector.extract_strided_slice %219 {offsets = [0, 80], sizes = [2, 16], strides = [1, 1]} : vector<2x96xf32> to vector<2x16xf32>
    %cst_28 = arith.constant dense<0.000000e+00> : vector<2x48xf32>
    %223 = tpu.matmul %218, %12, %cst_28 {dimension_numbers = #tpu.dot_dimension_numbers<[1], [0], [0], [1], [0, 0, 1, 1], [], []>} : vector<2x16xf32>, vector<16x48xf32>, vector<2x48xf32> -> vector<2x48xf32>
    %224 = vector.extract_strided_slice %223 {offsets = [0, 0], sizes = [2, 16], strides = [1, 1]} : vector<2x48xf32> to vector<2x16xf32>
    %225 = arith.addf %220, %224 : vector<2x16xf32>
    %226 = arith.negf %225 : vector<2x16xf32>
    %227 = math.exp %226 : vector<2x16xf32>
    %cst_29 = arith.constant 1.000000e+00 : f32
    %228 = vector.broadcast %cst_29 : f32 to vector<2x16xf32>
    %229 = arith.addf %228, %227 : vector<2x16xf32>
    %230 = arith.divf %228, %229 : vector<2x16xf32>
    %231 = vector.extract_strided_slice %223 {offsets = [0, 16], sizes = [2, 16], strides = [1, 1]} : vector<2x48xf32> to vector<2x16xf32>
    %232 = arith.addf %221, %231 : vector<2x16xf32>
    %233 = arith.negf %232 : vector<2x16xf32>
    %234 = math.exp %233 : vector<2x16xf32>
    %cst_30 = arith.constant 1.000000e+00 : f32
    %235 = vector.broadcast %cst_30 : f32 to vector<2x16xf32>
    %236 = arith.addf %235, %234 : vector<2x16xf32>
    %237 = arith.divf %235, %236 : vector<2x16xf32>
    %238 = vector.extract_strided_slice %223 {offsets = [0, 32], sizes = [2, 16], strides = [1, 1]} : vector<2x48xf32> to vector<2x16xf32>
    %239 = vector.broadcast %7 : vector<1x16xf32> to vector<2x16xf32>
    %240 = arith.addf %238, %239 : vector<2x16xf32>
    %241 = arith.mulf %230, %240 : vector<2x16xf32>
    %242 = arith.addf %222, %241 : vector<2x16xf32>
    %243 = math.tanh %242 : vector<2x16xf32>
    %244 = arith.subf %218, %243 : vector<2x16xf32>
    %245 = arith.mulf %237, %244 : vector<2x16xf32>
    %246 = arith.addf %243, %245 : vector<2x16xf32>
    %247 = vector.extract_strided_slice %20 {offsets = [8, 0], sizes = [2, 96], strides = [1, 1]} : vector<16x96xf32> to vector<2x96xf32>
    %248 = vector.extract_strided_slice %247 {offsets = [0, 48], sizes = [2, 16], strides = [1, 1]} : vector<2x96xf32> to vector<2x16xf32>
    %249 = vector.extract_strided_slice %247 {offsets = [0, 64], sizes = [2, 16], strides = [1, 1]} : vector<2x96xf32> to vector<2x16xf32>
    %250 = vector.extract_strided_slice %247 {offsets = [0, 80], sizes = [2, 16], strides = [1, 1]} : vector<2x96xf32> to vector<2x16xf32>
    %cst_31 = arith.constant dense<0.000000e+00> : vector<2x48xf32>
    %251 = tpu.matmul %246, %12, %cst_31 {dimension_numbers = #tpu.dot_dimension_numbers<[1], [0], [0], [1], [0, 0, 1, 1], [], []>} : vector<2x16xf32>, vector<16x48xf32>, vector<2x48xf32> -> vector<2x48xf32>
    %252 = vector.extract_strided_slice %251 {offsets = [0, 0], sizes = [2, 16], strides = [1, 1]} : vector<2x48xf32> to vector<2x16xf32>
    %253 = arith.addf %248, %252 : vector<2x16xf32>
    %254 = arith.negf %253 : vector<2x16xf32>
    %255 = math.exp %254 : vector<2x16xf32>
    %cst_32 = arith.constant 1.000000e+00 : f32
    %256 = vector.broadcast %cst_32 : f32 to vector<2x16xf32>
    %257 = arith.addf %256, %255 : vector<2x16xf32>
    %258 = arith.divf %256, %257 : vector<2x16xf32>
    %259 = vector.extract_strided_slice %251 {offsets = [0, 16], sizes = [2, 16], strides = [1, 1]} : vector<2x48xf32> to vector<2x16xf32>
    %260 = arith.addf %249, %259 : vector<2x16xf32>
    %261 = arith.negf %260 : vector<2x16xf32>
    %262 = math.exp %261 : vector<2x16xf32>
    %cst_33 = arith.constant 1.000000e+00 : f32
    %263 = vector.broadcast %cst_33 : f32 to vector<2x16xf32>
    %264 = arith.addf %263, %262 : vector<2x16xf32>
    %265 = arith.divf %263, %264 : vector<2x16xf32>
    %266 = vector.extract_strided_slice %251 {offsets = [0, 32], sizes = [2, 16], strides = [1, 1]} : vector<2x48xf32> to vector<2x16xf32>
    %267 = vector.broadcast %7 : vector<1x16xf32> to vector<2x16xf32>
    %268 = arith.addf %266, %267 : vector<2x16xf32>
    %269 = arith.mulf %258, %268 : vector<2x16xf32>
    %270 = arith.addf %250, %269 : vector<2x16xf32>
    %271 = math.tanh %270 : vector<2x16xf32>
    %272 = arith.subf %246, %271 : vector<2x16xf32>
    %273 = arith.mulf %265, %272 : vector<2x16xf32>
    %274 = arith.addf %271, %273 : vector<2x16xf32>
    %275 = tpu.concatenate %161, %274 in 1 : vector<2x16xf32>, vector<2x16xf32> -> vector<2x32xf32>
    %cst_34 = arith.constant dense<0.000000e+00> : vector<2x96xf32>
    %276 = tpu.matmul %275, %2, %cst_34 {dimension_numbers = #tpu.dot_dimension_numbers<[1], [0], [0], [1], [0, 0, 1, 1], [], []>} : vector<2x32xf32>, vector<32x96xf32>, vector<2x96xf32> -> vector<2x96xf32>
    %277 = vector.broadcast %4 : vector<1x96xf32> to vector<2x96xf32>
    %278 = arith.addf %276, %277 : vector<2x96xf32>
    %cst_35 = arith.constant 0.000000e+00 : f32
    %279 = vector.broadcast %cst_35 : f32 to vector<1x16xf32>
    %280 = vector.extract_strided_slice %278 {offsets = [0, 0], sizes = [1, 96], strides = [1, 1]} : vector<2x96xf32> to vector<1x96xf32>
    %281 = vector.extract_strided_slice %280 {offsets = [0, 0], sizes = [1, 16], strides = [1, 1]} : vector<1x96xf32> to vector<1x16xf32>
    %282 = vector.extract_strided_slice %280 {offsets = [0, 16], sizes = [1, 16], strides = [1, 1]} : vector<1x96xf32> to vector<1x16xf32>
    %283 = vector.extract_strided_slice %280 {offsets = [0, 32], sizes = [1, 16], strides = [1, 1]} : vector<1x96xf32> to vector<1x16xf32>
    %cst_36 = arith.constant dense<0.000000e+00> : vector<1x48xf32>
    %284 = tpu.matmul %279, %13, %cst_36 {dimension_numbers = #tpu.dot_dimension_numbers<[1], [0], [0], [1], [0, 0, 1, 1], [], []>} : vector<1x16xf32>, vector<16x48xf32>, vector<1x48xf32> -> vector<1x48xf32>
    %285 = vector.extract_strided_slice %284 {offsets = [0, 0], sizes = [1, 16], strides = [1, 1]} : vector<1x48xf32> to vector<1x16xf32>
    %286 = arith.addf %281, %285 : vector<1x16xf32>
    %287 = arith.negf %286 : vector<1x16xf32>
    %288 = math.exp %287 : vector<1x16xf32>
    %cst_37 = arith.constant 1.000000e+00 : f32
    %289 = vector.broadcast %cst_37 : f32 to vector<1x16xf32>
    %290 = arith.addf %289, %288 : vector<1x16xf32>
    %291 = arith.divf %289, %290 : vector<1x16xf32>
    %292 = vector.extract_strided_slice %284 {offsets = [0, 16], sizes = [1, 16], strides = [1, 1]} : vector<1x48xf32> to vector<1x16xf32>
    %293 = arith.addf %282, %292 : vector<1x16xf32>
    %294 = arith.negf %293 : vector<1x16xf32>
    %295 = math.exp %294 : vector<1x16xf32>
    %cst_38 = arith.constant 1.000000e+00 : f32
    %296 = vector.broadcast %cst_38 : f32 to vector<1x16xf32>
    %297 = arith.addf %296, %295 : vector<1x16xf32>
    %298 = arith.divf %296, %297 : vector<1x16xf32>
    %299 = vector.extract_strided_slice %284 {offsets = [0, 32], sizes = [1, 16], strides = [1, 1]} : vector<1x48xf32> to vector<1x16xf32>
    %300 = arith.addf %299, %8 : vector<1x16xf32>
    %301 = arith.mulf %291, %300 : vector<1x16xf32>
    %302 = arith.addf %283, %301 : vector<1x16xf32>
    %303 = math.tanh %302 : vector<1x16xf32>
    %304 = arith.subf %279, %303 : vector<1x16xf32>
    %305 = arith.mulf %298, %304 : vector<1x16xf32>
    %306 = arith.addf %303, %305 : vector<1x16xf32>
    %307 = vector.extract_strided_slice %278 {offsets = [1, 0], sizes = [1, 96], strides = [1, 1]} : vector<2x96xf32> to vector<1x96xf32>
    %308 = vector.extract_strided_slice %307 {offsets = [0, 0], sizes = [1, 16], strides = [1, 1]} : vector<1x96xf32> to vector<1x16xf32>
    %309 = vector.extract_strided_slice %307 {offsets = [0, 16], sizes = [1, 16], strides = [1, 1]} : vector<1x96xf32> to vector<1x16xf32>
    %310 = vector.extract_strided_slice %307 {offsets = [0, 32], sizes = [1, 16], strides = [1, 1]} : vector<1x96xf32> to vector<1x16xf32>
    %cst_39 = arith.constant dense<0.000000e+00> : vector<1x48xf32>
    %311 = tpu.matmul %306, %13, %cst_39 {dimension_numbers = #tpu.dot_dimension_numbers<[1], [0], [0], [1], [0, 0, 1, 1], [], []>} : vector<1x16xf32>, vector<16x48xf32>, vector<1x48xf32> -> vector<1x48xf32>
    %312 = vector.extract_strided_slice %311 {offsets = [0, 0], sizes = [1, 16], strides = [1, 1]} : vector<1x48xf32> to vector<1x16xf32>
    %313 = arith.addf %308, %312 : vector<1x16xf32>
    %314 = arith.negf %313 : vector<1x16xf32>
    %315 = math.exp %314 : vector<1x16xf32>
    %cst_40 = arith.constant 1.000000e+00 : f32
    %316 = vector.broadcast %cst_40 : f32 to vector<1x16xf32>
    %317 = arith.addf %316, %315 : vector<1x16xf32>
    %318 = arith.divf %316, %317 : vector<1x16xf32>
    %319 = vector.extract_strided_slice %311 {offsets = [0, 16], sizes = [1, 16], strides = [1, 1]} : vector<1x48xf32> to vector<1x16xf32>
    %320 = arith.addf %309, %319 : vector<1x16xf32>
    %321 = arith.negf %320 : vector<1x16xf32>
    %322 = math.exp %321 : vector<1x16xf32>
    %cst_41 = arith.constant 1.000000e+00 : f32
    %323 = vector.broadcast %cst_41 : f32 to vector<1x16xf32>
    %324 = arith.addf %323, %322 : vector<1x16xf32>
    %325 = arith.divf %323, %324 : vector<1x16xf32>
    %326 = vector.extract_strided_slice %311 {offsets = [0, 32], sizes = [1, 16], strides = [1, 1]} : vector<1x48xf32> to vector<1x16xf32>
    %327 = arith.addf %326, %8 : vector<1x16xf32>
    %328 = arith.mulf %318, %327 : vector<1x16xf32>
    %329 = arith.addf %310, %328 : vector<1x16xf32>
    %330 = math.tanh %329 : vector<1x16xf32>
    %331 = arith.subf %306, %330 : vector<1x16xf32>
    %332 = arith.mulf %325, %331 : vector<1x16xf32>
    %333 = arith.addf %330, %332 : vector<1x16xf32>
    %cst_42 = arith.constant 0.000000e+00 : f32
    %334 = vector.broadcast %cst_42 : f32 to vector<1x16xf32>
    %335 = vector.extract_strided_slice %278 {offsets = [1, 0], sizes = [1, 96], strides = [1, 1]} : vector<2x96xf32> to vector<1x96xf32>
    %336 = vector.extract_strided_slice %335 {offsets = [0, 48], sizes = [1, 16], strides = [1, 1]} : vector<1x96xf32> to vector<1x16xf32>
    %337 = vector.extract_strided_slice %335 {offsets = [0, 64], sizes = [1, 16], strides = [1, 1]} : vector<1x96xf32> to vector<1x16xf32>
    %338 = vector.extract_strided_slice %335 {offsets = [0, 80], sizes = [1, 16], strides = [1, 1]} : vector<1x96xf32> to vector<1x16xf32>
    %cst_43 = arith.constant dense<0.000000e+00> : vector<1x48xf32>
    %339 = tpu.matmul %334, %14, %cst_43 {dimension_numbers = #tpu.dot_dimension_numbers<[1], [0], [0], [1], [0, 0, 1, 1], [], []>} : vector<1x16xf32>, vector<16x48xf32>, vector<1x48xf32> -> vector<1x48xf32>
    %340 = vector.extract_strided_slice %339 {offsets = [0, 0], sizes = [1, 16], strides = [1, 1]} : vector<1x48xf32> to vector<1x16xf32>
    %341 = arith.addf %336, %340 : vector<1x16xf32>
    %342 = arith.negf %341 : vector<1x16xf32>
    %343 = math.exp %342 : vector<1x16xf32>
    %cst_44 = arith.constant 1.000000e+00 : f32
    %344 = vector.broadcast %cst_44 : f32 to vector<1x16xf32>
    %345 = arith.addf %344, %343 : vector<1x16xf32>
    %346 = arith.divf %344, %345 : vector<1x16xf32>
    %347 = vector.extract_strided_slice %339 {offsets = [0, 16], sizes = [1, 16], strides = [1, 1]} : vector<1x48xf32> to vector<1x16xf32>
    %348 = arith.addf %337, %347 : vector<1x16xf32>
    %349 = arith.negf %348 : vector<1x16xf32>
    %350 = math.exp %349 : vector<1x16xf32>
    %cst_45 = arith.constant 1.000000e+00 : f32
    %351 = vector.broadcast %cst_45 : f32 to vector<1x16xf32>
    %352 = arith.addf %351, %350 : vector<1x16xf32>
    %353 = arith.divf %351, %352 : vector<1x16xf32>
    %354 = vector.extract_strided_slice %339 {offsets = [0, 32], sizes = [1, 16], strides = [1, 1]} : vector<1x48xf32> to vector<1x16xf32>
    %355 = arith.addf %354, %9 : vector<1x16xf32>
    %356 = arith.mulf %346, %355 : vector<1x16xf32>
    %357 = arith.addf %338, %356 : vector<1x16xf32>
    %358 = math.tanh %357 : vector<1x16xf32>
    %359 = arith.subf %334, %358 : vector<1x16xf32>
    %360 = arith.mulf %353, %359 : vector<1x16xf32>
    %361 = arith.addf %358, %360 : vector<1x16xf32>
    %362 = vector.extract_strided_slice %278 {offsets = [0, 0], sizes = [1, 96], strides = [1, 1]} : vector<2x96xf32> to vector<1x96xf32>
    %363 = vector.extract_strided_slice %362 {offsets = [0, 48], sizes = [1, 16], strides = [1, 1]} : vector<1x96xf32> to vector<1x16xf32>
    %364 = vector.extract_strided_slice %362 {offsets = [0, 64], sizes = [1, 16], strides = [1, 1]} : vector<1x96xf32> to vector<1x16xf32>
    %365 = vector.extract_strided_slice %362 {offsets = [0, 80], sizes = [1, 16], strides = [1, 1]} : vector<1x96xf32> to vector<1x16xf32>
    %cst_46 = arith.constant dense<0.000000e+00> : vector<1x48xf32>
    %366 = tpu.matmul %361, %14, %cst_46 {dimension_numbers = #tpu.dot_dimension_numbers<[1], [0], [0], [1], [0, 0, 1, 1], [], []>} : vector<1x16xf32>, vector<16x48xf32>, vector<1x48xf32> -> vector<1x48xf32>
    %367 = vector.extract_strided_slice %366 {offsets = [0, 0], sizes = [1, 16], strides = [1, 1]} : vector<1x48xf32> to vector<1x16xf32>
    %368 = arith.addf %363, %367 : vector<1x16xf32>
    %369 = arith.negf %368 : vector<1x16xf32>
    %370 = math.exp %369 : vector<1x16xf32>
    %cst_47 = arith.constant 1.000000e+00 : f32
    %371 = vector.broadcast %cst_47 : f32 to vector<1x16xf32>
    %372 = arith.addf %371, %370 : vector<1x16xf32>
    %373 = arith.divf %371, %372 : vector<1x16xf32>
    %374 = vector.extract_strided_slice %366 {offsets = [0, 16], sizes = [1, 16], strides = [1, 1]} : vector<1x48xf32> to vector<1x16xf32>
    %375 = arith.addf %364, %374 : vector<1x16xf32>
    %376 = arith.negf %375 : vector<1x16xf32>
    %377 = math.exp %376 : vector<1x16xf32>
    %cst_48 = arith.constant 1.000000e+00 : f32
    %378 = vector.broadcast %cst_48 : f32 to vector<1x16xf32>
    %379 = arith.addf %378, %377 : vector<1x16xf32>
    %380 = arith.divf %378, %379 : vector<1x16xf32>
    %381 = vector.extract_strided_slice %366 {offsets = [0, 32], sizes = [1, 16], strides = [1, 1]} : vector<1x48xf32> to vector<1x16xf32>
    %382 = arith.addf %381, %9 : vector<1x16xf32>
    %383 = arith.mulf %373, %382 : vector<1x16xf32>
    %384 = arith.addf %365, %383 : vector<1x16xf32>
    %385 = math.tanh %384 : vector<1x16xf32>
    %386 = arith.subf %361, %385 : vector<1x16xf32>
    %387 = arith.mulf %380, %386 : vector<1x16xf32>
    %388 = arith.addf %385, %387 : vector<1x16xf32>
    %389 = tpu.concatenate %306, %333 in 0 : vector<1x16xf32>, vector<1x16xf32> -> vector<2x16xf32>
    %390 = tpu.concatenate %388, %361 in 0 : vector<1x16xf32>, vector<1x16xf32> -> vector<2x16xf32>
    %391 = tpu.concatenate %389, %390 in 1 : vector<2x16xf32>, vector<2x16xf32> -> vector<2x32xf32>
    %cst_49 = arith.constant dense<0.000000e+00> : vector<2x48xf32>
    %392 = tpu.matmul %391, %15, %cst_49 {dimension_numbers = #tpu.dot_dimension_numbers<[1], [0], [0], [1], [0, 0, 1, 1], [], []>} : vector<2x32xf32>, vector<32x48xf32>, vector<2x48xf32> -> vector<2x48xf32>
    %393 = vector.broadcast %16 : vector<1x48xf32> to vector<2x48xf32>
    %394 = arith.addf %392, %393 : vector<2x48xf32>
    %395 = vector.extract_strided_slice %394 {offsets = [0, 0], sizes = [2, 5], strides = [1, 1]} : vector<2x48xf32> to vector<2x5xf32>
    %c0_50 = arith.constant 0 : index
    %c0_51 = arith.constant 0 : index
    %396 = vector.load %arg4[%c0_50, %c0_51] : memref<2x5xf32, #tpu.memory_space<vmem>>, vector<2x5xf32>
    tpu.vector_store %arg4[%c0_50, %c0_51], %395 {strides = array<i32>} : memref<2x5xf32, #tpu.memory_space<vmem>>, vector<2x5xf32>,
    %397 = tpu.iota {dimensions = array<i32: 1>} : vector<1x5xi32>
    %cst_52 = arith.constant 0.000000e+00 : f32
    %398 = vector.broadcast %cst_52 : f32 to vector<1x1xf32>
    %399 = vector.extract_strided_slice %395 {offsets = [0, 0], sizes = [1, 5], strides = [1, 1]} : vector<2x5xf32> to vector<1x5xf32>
    %cst_53 = arith.constant dense<0xFF800000> : vector<1xf32>
    %400 = vector.multi_reduction <maximumf>, %399, %cst_53 [1] : vector<1x5xf32> to vector<1xf32>
    %401 = vector.shape_cast %400 : vector<1xf32> to vector<1x1xf32>
    %402 = vector.broadcast %401 : vector<1x1xf32> to vector<1x5xf32>
    %403 = arith.subf %399, %402 : vector<1x5xf32>
    %404 = math.exp %403 : vector<1x5xf32>
    %cst_54 = arith.constant dense<0.000000e+00> : vector<1xf32>
    %405 = vector.multi_reduction <add>, %404, %cst_54 [1] : vector<1x5xf32> to vector<1xf32>
    %406 = vector.shape_cast %405 : vector<1xf32> to vector<1x1xf32>
    %407 = math.log %406 : vector<1x1xf32>
    %408 = arith.addf %407, %401 : vector<1x1xf32>
    %c0_55 = arith.constant 0 : index
    %409 = memref.load %arg1[%c0_55] : memref<2xi32, #tpu.memory_space<smem>>
    %410 = vector.broadcast %409 : i32 to vector<1x5xi32>
    %411 = arith.cmpi eq, %397, %410 : vector<1x5xi32>
    %cst_56 = arith.constant 0.000000e+00 : f32
    %412 = vector.broadcast %cst_56 : f32 to vector<1x5xf32>
    %413 = arith.select %411, %399, %412 : vector<1x5xi1>, vector<1x5xf32>
    %cst_57 = arith.constant dense<0.000000e+00> : vector<1xf32>
    %414 = vector.multi_reduction <add>, %413, %cst_57 [1] : vector<1x5xf32> to vector<1xf32>
    %415 = vector.shape_cast %414 : vector<1xf32> to vector<1x1xf32>
    %416 = arith.subf %408, %415 : vector<1x1xf32>
    %417 = arith.addf %398, %416 : vector<1x1xf32>
    %418 = vector.extract_strided_slice %395 {offsets = [1, 0], sizes = [1, 5], strides = [1, 1]} : vector<2x5xf32> to vector<1x5xf32>
    %cst_58 = arith.constant dense<0xFF800000> : vector<1xf32>
    %419 = vector.multi_reduction <maximumf>, %418, %cst_58 [1] : vector<1x5xf32> to vector<1xf32>
    %420 = vector.shape_cast %419 : vector<1xf32> to vector<1x1xf32>
    %421 = vector.broadcast %420 : vector<1x1xf32> to vector<1x5xf32>
    %422 = arith.subf %418, %421 : vector<1x5xf32>
    %423 = math.exp %422 : vector<1x5xf32>
    %cst_59 = arith.constant dense<0.000000e+00> : vector<1xf32>
    %424 = vector.multi_reduction <add>, %423, %cst_59 [1] : vector<1x5xf32> to vector<1xf32>
    %425 = vector.shape_cast %424 : vector<1xf32> to vector<1x1xf32>
    %426 = math.log %425 : vector<1x1xf32>
    %427 = arith.addf %426, %420 : vector<1x1xf32>
    %c1 = arith.constant 1 : index
    %428 = memref.load %arg1[%c1] : memref<2xi32, #tpu.memory_space<smem>>
    %429 = vector.broadcast %428 : i32 to vector<1x5xi32>
    %430 = arith.cmpi eq, %397, %429 : vector<1x5xi32>
    %cst_60 = arith.constant 0.000000e+00 : f32
    %431 = vector.broadcast %cst_60 : f32 to vector<1x5xf32>
    %432 = arith.select %430, %418, %431 : vector<1x5xi1>, vector<1x5xf32>
    %cst_61 = arith.constant dense<0.000000e+00> : vector<1xf32>
    %433 = vector.multi_reduction <add>, %432, %cst_61 [1] : vector<1x5xf32> to vector<1xf32>
    %434 = vector.shape_cast %433 : vector<1xf32> to vector<1x1xf32>
    %435 = arith.subf %427, %434 : vector<1x1xf32>
    %436 = arith.addf %417, %435 : vector<1x1xf32>
    %cst_62 = arith.constant 5.000000e-01 : f32
    %437 = vector.broadcast %cst_62 : f32 to vector<1x1xf32>
    %438 = arith.mulf %436, %437 : vector<1x1xf32>
    %c0_63 = arith.constant 0 : index
    %c0_64 = arith.constant 0 : index
    %439 = vector.load %arg5[%c0_63, %c0_64] : memref<1x1xf32, #tpu.memory_space<vmem>>, vector<1x1xf32>
    tpu.vector_store %arg5[%c0_63, %c0_64], %438 {strides = array<i32>} : memref<1x1xf32, #tpu.memory_space<vmem>>, vector<1x1xf32>,
    return
  }
}

</mosaic_0001>

<llo_original>
// kernel: mr_dakgnn_forward.1
$region0: #{mr_dakgnn_forward.1}
  #allocation0 [shape = 'u32[]', space=smem, size = 0x4, offset = 0x4, fixed_abs, tag = 'smem constant byte address 0x4 - core index']
  #allocation1 [shape = 'u32[144,128]{1,0:T(1,128)}', space=vmem, size = 0x12000, scoped, tag = 'internal scratch']
  %s0 = inlined_call_operand.vmem [shape: f32[16,16], index: 0, kind: input, shape index: {}]
  %s1 = inlined_call_operand.vmem [shape: s32[2], index: 1, kind: input, shape index: {}]
  %s2 = inlined_call_operand.vmem [shape: f32[51,96], index: 2, kind: input, shape index: {}]
  %s3 = inlined_call_operand.vmem [shape: f32[97,48], index: 3, kind: input, shape index: {}]
  %s4 = inlined_call_operand.hbm [shape: f32[2,5], index: 4, kind: output, shape index: {0}]
  %s5 = inlined_call_operand.hbm [shape: f32[1,1], index: 5, kind: output, shape index: {1}]
  %6 = xla_tuple %s4, %s5
  %s7 = sld [smem:[#allocation0]]
  $region38: #{mr_dakgnn_forward.1} parent=0
    _
  %s9 = ssub.s32 1, %s7
  %s10 = scalar_select 0, %s9, %s7
  $region1: #{mr_dakgnn_forward.1} parent=0
    #allocation2 [shape = 'u8[512]{0}', space=smem, size = 0x200, scoped, tag = 'input window, operand 1, single buffered']
    #allocation3 [shape = 's32[1]{0}', space=sflag, size = 0x4, scoped, tag = 'scoped memory for mr_dakgnn_forward.1']
    #allocation4 [shape = 's32[1]{0}', space=sflag, size = 0x4, scoped, tag = 'scoped memory for mr_dakgnn_forward.1']
    #allocation5 [shape = 'u8[1024]{0}', space=vmem, size = 0x400, scoped, tag = 'output window, operand 0, single buffered']
    #allocation6 [shape = 'u8[512]{0}', space=vmem, size = 0x400, scoped, tag = 'output window, operand 1, single buffered']
    #allocation7 [shape = 's32[1]{0}', space=sflag, size = 0x4, scoped, tag = 'scoped memory for mr_dakgnn_forward.1']
    %11 = vsyncpa [#allocation4], 0
    %12 = vsyncpa [#allocation3], 0
    %13 = vsyncpa [#allocation7], 0
    // Predicated region
    $region2: #{mr_dakgnn_forward.1} parent=1 // pred_check
      _
    $region3: #{mr_dakgnn_forward.1} parent=1 // pred_check_branch
      %15 = sbr.rel (0) target = $region5
    $region4: #{mr_dakgnn_forward.1} parent=1 // pred_region
      _
    $region5: #{mr_dakgnn_forward.1} parent=1 // pred_fallthru
      _
    // Predicated region
    $region6: #{mr_dakgnn_forward.1} parent=1 // pred_check
      _
    $region7: #{mr_dakgnn_forward.1} parent=1 // pred_check_branch
      %17 = sbr.rel (0) target = $region9
    $region8: #{mr_dakgnn_forward.1} parent=1 // pred_region
      %s19 = ssub.s32 16, 16
      %20 = vsyncadd [#allocation4], %s19
      %s22 = sshll.u32 %s1, 4
      %s23 = int_to_ptr.vmem [resolvable:$true] %s22
      %25 = dma.vmem_to_smem %s23, 16, [#allocation2], [#allocation4]
    $region9: #{mr_dakgnn_forward.1} parent=1 // pred_fallthru
      _
    // Predicated region
    $region10: #{mr_dakgnn_forward.1} parent=1 // pred_check
      _
    $region11: #{mr_dakgnn_forward.1} parent=1 // pred_check_branch
      %27 = sbr.rel (0) target = $region13
    $region12: #{mr_dakgnn_forward.1} parent=1 // pred_region
      _
    $region13: #{mr_dakgnn_forward.1} parent=1 // pred_fallthru
      _
    // Predicated region
    $region14: #{mr_dakgnn_forward.1} parent=1 // pred_check
      _
    $region15: #{mr_dakgnn_forward.1} parent=1 // pred_check_branch
      %29 = sbr.rel (0) target = $region17
    $region16: #{mr_dakgnn_forward.1} parent=1 // pred_region
      _
    $region17: #{mr_dakgnn_forward.1} parent=1 // pred_fallthru
      _
    // Predicated region
    $region18: #{mr_dakgnn_forward.1} parent=1 // pred_check
      _
    $region19: #{mr_dakgnn_forward.1} parent=1 // pred_check_branch
      %31 = sbr.rel (0) target = $region21
    $region20: #{mr_dakgnn_forward.1} parent=1 // pred_region
      %32 = dma.done [#allocation4], 16
    $region21: #{mr_dakgnn_forward.1} parent=1 // pred_fallthru
      _
    %33 = sfence
    %v34 = vld [vmem:[%s2] sm:$0xff]
    %v35 = vld [vmem:[%s2 + $0x8] sm:$0xff]
    %v36 = vld [vmem:[%s2 + $0x10] sm:$0xff]
    %v37 = vld [vmem:[%s2 + $0x18] sm:$0xff]
    %v38 = vld [vmem:[%s2 + $0x20] sm:$0xff]
    %v39 = vld [vmem:[%s2 + $0x28] sm:$0xff]
    %v40 = vld [vmem:[%s2 + $0x30] sm:$0x7]
    %v41 = vld [vmem:[%s3] sm:$0xff]
    %v42 = vld [vmem:[%s3 + $0x8] sm:$0xff]
    %v43 = vld [vmem:[%s3 + $0x10] sm:$0xff]
    %v44 = vld [vmem:[%s3 + $0x18] sm:$0xff]
    %v45 = vld [vmem:[%s3 + $0x20] sm:$0xff]
    %v46 = vld [vmem:[%s3 + $0x28] sm:$0xff]
    %v47 = vld [vmem:[%s3 + $0x30] sm:$0xff]
    %v48 = vld [vmem:[%s3 + $0x38] sm:$0xff]
    %v49 = vld [vmem:[%s3 + $0x40] sm:$0xff]
    %v50 = vld [vmem:[%s3 + $0x48] sm:$0xff]
    %v51 = vld [vmem:[%s3 + $0x50] sm:$0xff]
    %v52 = vld [vmem:[%s3 + $0x58] sm:$0xff]
    %v53 = vld [vmem:[%s3 + $0x60] sm:$0x1]
    %v54 = vld [vmem:[%s0] sm:$0xff]
    %v55 = vld [vmem:[%s0 + $0x8] sm:$0xff]
    %v56 = vlaneseq
    %v57 = vshrl.u32 %v56, 7
    %v58 = vsub.s32 0, %v57
    %v59 = vrot.slane %v40, %v58
    %vm60 = vcmask 130048
    %v62 = vsel %vm60, %v54, 0
    %v65 = vsel %vm60, %v55, 0
    %67 = vmatprep.subr.mxu0 0.0
    %68 = vmatpush1.msra.mxu0 %v34
    %69 = vmatprep.subr.mxu0 0.0
    %70 = vmatpush1.msra.mxu0 %v35
    %71 = vmatprep.subr.mxu0 0.0
    %72 = vmatpush1.msra.mxu0 0.0
    %73 = vmatprep.subr.mxu0 0.0
    %74 = vmatpush1.msra.mxu0 0.0
    %75 = vmatprep.subr.mxu0 0.0
    %76 = vmatpush1.msra.mxu0 0.0
    %77 = vmatprep.subr.mxu0 0.0
    %78 = vmatpush1.msra.mxu0 0.0
    %79 = vmatprep.subr.mxu0 0.0
    %80 = vmatpush1.msra.mxu0 0.0
    %81 = vmatprep.subr.mxu0 0.0
    %82 = vmatpush1.msra.mxu0 0.0
    %83 = vmatprep.subr.mxu0 0.0
    %84 = vmatpush1.msra.mxu0 0.0
    %85 = vmatprep.subr.mxu0 0.0
    %86 = vmatpush1.msra.mxu0 0.0
    %87 = vmatprep.subr.mxu0 0.0
    %88 = vmatpush1.msra.mxu0 0.0
    %89 = vmatprep.subr.mxu0 0.0
    %90 = vmatpush1.msra.mxu0 0.0
    %91 = vmatprep.subr.mxu0 0.0
    %92 = vmatpush1.msra.mxu0 0.0
    %93 = vmatprep.subr.mxu0 0.0
    %94 = vmatpush1.msra.mxu0 0.0
    %95 = vmatprep.subr.mxu0 0.0
    %96 = vmatpush1.msra.mxu0 0.0
    %97 = vmatprep.subr.mxu0 0.0
    %98 = vmatpush1.msra.mxu0 0.0
    %99 = vmatprep.subr.mxu0 0.0
    %100 = vmatpush1.msra.mxu0 0.0
    %101 = vmatprep.subr.mxu0 0.0
    %102 = vmatpush1.msra.mxu0 0.0
    %103 = vmatprep.subr.mxu0 0.0
    %104 = vmatpush1.msra.mxu0 0.0
    %105 = vmatprep.subr.mxu0 0.0
    %106 = vmatpush1.msra.mxu0 0.0
    %107 = vmatprep.subr.mxu0 0.0
    %108 = vmatpush1.msra.mxu0 0.0
    %109 = vmatprep.subr.mxu0 0.0
    %110 = vmatpush1.msra.mxu0 0.0
    %111 = vmatprep.subr.mxu0 0.0
    %112 = vmatpush1.msra.mxu0 0.0
    %113 = vmatprep.subr.mxu0 0.0
    %114 = vmatpush1.msra.mxu0 0.0
    %115 = vmatprep.subr.mxu0 0.0
    %116 = vmatpush1.msra.mxu0 0.0
    %117 = vmatprep.subr.mxu0 0.0
    %118 = vmatpush1.msra.mxu0 0.0
    %119 = vmatprep.subr.mxu0 0.0
    %120 = vmatpush1.msra.mxu0 0.0
    %121 = vmatprep.subr.mxu0 0.0
    %122 = vmatpush1.msra.mxu0 0.0
    %123 = vmatprep.subr.mxu0 0.0
    %124 = vmatpush1.msra.mxu0 0.0
    %125 = vmatprep.subr.mxu0 0.0
    %126 = vmatpush1.msra.mxu0 0.0
    %127 = vmatprep.subr.mxu0 0.0
    %128 = vmatpush1.msra.mxu0 0.0
    %129 = vmatprep.subr.mxu0 0.0
    %130 = vmatpush1.msra.mxu0 0.0
    %131 = vmatprep.mubr.f32.mxu0 0.0
    %132 = vmatmul.mubr.f32.gmra.mrb[0].mxu0 %v62
    %v133 = vpop.f32.mrb[0].mxu0
    %v134 = vadd.f32 %v59, %v133
    %v135 = vpop.f32.mrb[0].mxu0
    %136 = vmatprep.mubr.f32.mxu0 0.0
    %137 = vmatmul.mubr.f32.gmra.mrb[0].mxu0 %v65
    %v138 = vpop.f32.mrb[0].mxu0
    %v139 = vadd.f32 %v59, %v138
    %v140 = vpop.f32.mrb[0].mxu0
    %141 = vdwg.mxu0
    %v143 = vsel %vm60, 0.0, 0
    %145 = vmatprep.subr.mxu0 0.0
    %146 = vmatpush1.msra.mxu0 %v41
    %147 = vmatprep.subr.mxu0 0.0
    %148 = vmatpush1.msra.mxu0 %v42
    %149 = vmatprep.subr.mxu0 0.0
    %150 = vmatpush1.msra.mxu0 0.0
    %151 = vmatprep.subr.mxu0 0.0
    %152 = vmatpush1.msra.mxu0 0.0
    %153 = vmatprep.subr.mxu0 0.0
    %154 = vmatpush1.msra.mxu0 0.0
    %155 = vmatprep.subr.mxu0 0.0
    %156 = vmatpush1.msra.mxu0 0.0
    %157 = vmatprep.subr.mxu0 0.0
    %158 = vmatpush1.msra.mxu0 0.0
    %159 = vmatprep.subr.mxu0 0.0
    %160 = vmatpush1.msra.mxu0 0.0
    %161 = vmatprep.subr.mxu0 0.0
    %162 = vmatpush1.msra.mxu0 0.0
    %163 = vmatprep.subr.mxu0 0.0
    %164 = vmatpush1.msra.mxu0 0.0
    %165 = vmatprep.subr.mxu0 0.0
    %166 = vmatpush1.msra.mxu0 0.0
    %167 = vmatprep.subr.mxu0 0.0
    %168 = vmatpush1.msra.mxu0 0.0
    %169 = vmatprep.subr.mxu0 0.0
    %170 = vmatpush1.msra.mxu0 0.0
    %171 = vmatprep.subr.mxu0 0.0
    %172 = vmatpush1.msra.mxu0 0.0
    %173 = vmatprep.subr.mxu0 0.0
    %174 = vmatpush1.msra.mxu0 0.0
    %175 = vmatprep.subr.mxu0 0.0
    %176 = vmatpush1.msra.mxu0 0.0
    %177 = vmatprep.subr.mxu0 0.0
    %178 = vmatpush1.msra.mxu0 0.0
    %179 = vmatprep.subr.mxu0 0.0
    %180 = vmatpush1.msra.mxu0 0.0
    %181 = vmatprep.subr.mxu0 0.0
    %182 = vmatpush1.msra.mxu0 0.0
    %183 = vmatprep.subr.mxu0 0.0
    %184 = vmatpush1.msra.mxu0 0.0
    %185 = vmatprep.subr.mxu0 0.0
    %186 = vmatpush1.msra.mxu0 0.0
    %187 = vmatprep.subr.mxu0 0.0
    %188 = vmatpush1.msra.mxu0 0.0
    %189 = vmatprep.subr.mxu0 0.0
    %190 = vmatpush1.msra.mxu0 0.0
    %191 = vmatprep.subr.mxu0 0.0
    %192 = vmatpush1.msra.mxu0 0.0
    %193 = vmatprep.subr.mxu0 0.0
    %194 = vmatpush1.msra.mxu0 0.0
    %195 = vmatprep.subr.mxu0 0.0
    %196 = vmatpush1.msra.mxu0 0.0
    %197 = vmatprep.subr.mxu0 0.0
    %198 = vmatpush1.msra.mxu0 0.0
    %199 = vmatprep.subr.mxu0 0.0
    %200 = vmatpush1.msra.mxu0 0.0
    %201 = vmatprep.subr.mxu0 0.0
    %202 = vmatpush1.msra.mxu0 0.0
    %203 = vmatprep.subr.mxu0 0.0
    %204 = vmatpush1.msra.mxu0 0.0
    %205 = vmatprep.subr.mxu0 0.0
    %206 = vmatpush1.msra.mxu0 0.0
    %207 = vmatprep.subr.mxu0 0.0
    %208 = vmatpush1.msra.mxu0 0.0
    %209 = vmatprep.mubr.f32.mxu0 0.0
    %210 = vmatmul.mubr.f32.gmra.mrb[0].mxu0 %v143
    %v211 = vpop.f32.mrb[0].mxu0
    %v212 = vadd.f32 0.0, %v211
    %v213 = vpop.f32.mrb[0].mxu0
    %214 = vdwg.mxu0
    %v215 = vadd.f32 %v134, %v212
    %v216 = vxor.u32 %v215, 2147483648
    %v217 = vmul.f32 %v216, 1.442695
    %v218 = vpow.pop %v217
    %v219 = vadd.f32 %v218, 1.0
    %v220 = vrcp.pop %v219
    %v221 = vmul.f32 1.0, %v220
    %v222 = vlaneseq
    %v223 = vshrl.u32 %v222, 7
    %v224 = vsub.s32 2, %v223
    %v225 = vrot.slane %v40, %v224
    %227 = vrot.lane.b32.xlu0 %v225, 32
    %v228 = vpop.permute.xlu0 %227
    %v230 = vadd.f32 %v212, %v228
    %232 = vrot.lane.b32.xlu0 %v230, 96
    %v233 = vpop.permute.xlu0 %232
    %v235 = vmul.f32 %v221, %v233
    %237 = vrot.lane.b32.xlu0 %v235, 32
    %v238 = vpop.permute.xlu0 %237
    %v240 = vadd.f32 %v134, %v238
    %v241 = vtanh.pop %v240
    %v242 = vsub.f32 0.0, %v241
    %244 = vrot.lane.b32.xlu0 %v242, 112
    %v245 = vpop.permute.xlu0 %244
    %v247 = vmul.f32 %v221, %v245
    %249 = vrot.lane.b32.xlu0 %v247, 16
    %v250 = vpop.permute.xlu0 %249
    %v252 = vadd.f32 %v241, %v250
    %254 = vrot.lane.b32.xlu0 %v252, 96
    %v255 = vpop.permute.xlu0 %254
    %v256 = vsel %vm60, %v255, 0
    %258 = vmatprep.subr.mxu0 0.0
    %259 = vmatpush1.msra.mxu0 %v41
    %260 = vmatprep.subr.mxu0 0.0
    %261 = vmatpush1.msra.mxu0 %v42
    %262 = vmatprep.subr.mxu0 0.0
    %263 = vmatpush1.msra.mxu0 0.0
    %264 = vmatprep.subr.mxu0 0.0
    %265 = vmatpush1.msra.mxu0 0.0
    %266 = vmatprep.subr.mxu0 0.0
    %267 = vmatpush1.msra.mxu0 0.0
    %268 = vmatprep.subr.mxu0 0.0
    %269 = vmatpush1.msra.mxu0 0.0
    %270 = vmatprep.subr.mxu0 0.0
    %271 = vmatpush1.msra.mxu0 0.0
    %272 = vmatprep.subr.mxu0 0.0
    %273 = vmatpush1.msra.mxu0 0.0
    %274 = vmatprep.subr.mxu0 0.0
    %275 = vmatpush1.msra.mxu0 0.0
    %276 = vmatprep.subr.mxu0 0.0
    %277 = vmatpush1.msra.mxu0 0.0
    %278 = vmatprep.subr.mxu0 0.0
    %279 = vmatpush1.msra.mxu0 0.0
    %280 = vmatprep.subr.mxu0 0.0
    %281 = vmatpush1.msra.mxu0 0.0
    %282 = vmatprep.subr.mxu0 0.0
    %283 = vmatpush1.msra.mxu0 0.0
    %284 = vmatprep.subr.mxu0 0.0
    %285 = vmatpush1.msra.mxu0 0.0
    %286 = vmatprep.subr.mxu0 0.0
    %287 = vmatpush1.msra.mxu0 0.0
    %288 = vmatprep.subr.mxu0 0.0
    %289 = vmatpush1.msra.mxu0 0.0
    %290 = vmatprep.subr.mxu0 0.0
    %291 = vmatpush1.msra.mxu0 0.0
    %292 = vmatprep.subr.mxu0 0.0
    %293 = vmatpush1.msra.mxu0 0.0
    %294 = vmatprep.subr.mxu0 0.0
    %295 = vmatpush1.msra.mxu0 0.0
    %296 = vmatprep.subr.mxu0 0.0
    %297 = vmatpush1.msra.mxu0 0.0
    %298 = vmatprep.subr.mxu0 0.0
    %299 = vmatpush1.msra.mxu0 0.0
    %300 = vmatprep.subr.mxu0 0.0
    %301 = vmatpush1.msra.mxu0 0.0
    %302 = vmatprep.subr.mxu0 0.0
    %303 = vmatpush1.msra.mxu0 0.0
    %304 = vmatprep.subr.mxu0 0.0
    %305 = vmatpush1.msra.mxu0 0.0
    %306 = vmatprep.subr.mxu0 0.0
    %307 = vmatpush1.msra.mxu0 0.0
    %308 = vmatprep.subr.mxu0 0.0
    %309 = vmatpush1.msra.mxu0 0.0
    %310 = vmatprep.subr.mxu0 0.0
    %311 = vmatpush1.msra.mxu0 0.0
    %312 = vmatprep.subr.mxu0 0.0
    %313 = vmatpush1.msra.mxu0 0.0
    %314 = vmatprep.subr.mxu0 0.0
    %315 = vmatpush1.msra.mxu0 0.0
    %316 = vmatprep.subr.mxu0 0.0
    %317 = vmatpush1.msra.mxu0 0.0
    %318 = vmatprep.subr.mxu0 0.0
    %319 = vmatpush1.msra.mxu0 0.0
    %320 = vmatprep.subr.mxu0 0.0
    %321 = vmatpush1.msra.mxu0 0.0
    %322 = vmatprep.mubr.f32.mxu0 0.0
    %323 = vmatmul.mubr.f32.gmra.mrb[0].mxu0 %v256
    %v324 = vpop.f32.mrb[0].mxu0
    %v325 = vadd.f32 0.0, %v324
    %v326 = vpop.f32.mrb[0].mxu0
    %327 = vdwg.mxu0
    %v329 = vrot.slane %v325, 6
    %v331 = vadd.f32 %v134, %v329
    %v332 = vxor.u32 %v331, 2147483648
    %v333 = vmul.f32 %v332, 1.442695
    %v334 = vpow.pop %v333
    %v335 = vadd.f32 %v334, 1.0
    %v336 = vrcp.pop %v335
    %v337 = vmul.f32 1.0, %v336
    %v338 = vadd.f32 %v325, %v228
    %v340 = vrot.slane %v338, 6
    %341 = vrot.lane.b32.xlu0 %v340, 96
    %v342 = vpop.permute.xlu0 %341
    %v344 = vmul.f32 %v337, %v342
    %346 = vrot.lane.b32.xlu0 %v344, 32
    %v347 = vpop.permute.xlu0 %346
    %v349 = vadd.f32 %v134, %v347
    %v350 = vtanh.pop %v349
    %v352 = vrot.slane %v350, 2
    %v354 = vsub.f32 %v252, %v352
    %v356 = vrot.slane %v354, 6
    %357 = vrot.lane.b32.xlu0 %v356, 112
    %v358 = vpop.permute.xlu0 %357
    %v360 = vmul.f32 %v337, %v358
    %362 = vrot.lane.b32.xlu0 %v360, 16
    %v363 = vpop.permute.xlu0 %362
    %v365 = vadd.f32 %v350, %v363
    %v367 = vrot.slane %v365, 2
    %368 = vrot.lane.b32.xlu0 %v367, 96
    %v369 = vpop.permute.xlu0 %368
    %v370 = vsel %vm60, %v369, 0
    %372 = vmatprep.subr.mxu0 0.0
    %373 = vmatpush1.msra.mxu0 %v41
    %374 = vmatprep.subr.mxu0 0.0
    %375 = vmatpush1.msra.mxu0 %v42
    %376 = vmatprep.subr.mxu0 0.0
    %377 = vmatpush1.msra.mxu0 0.0
    %378 = vmatprep.subr.mxu0 0.0
    %379 = vmatpush1.msra.mxu0 0.0
    %380 = vmatprep.subr.mxu0 0.0
    %381 = vmatpush1.msra.mxu0 0.0
    %382 = vmatprep.subr.mxu0 0.0
    %383 = vmatpush1.msra.mxu0 0.0
    %384 = vmatprep.subr.mxu0 0.0
    %385 = vmatpush1.msra.mxu0 0.0
    %386 = vmatprep.subr.mxu0 0.0
    %387 = vmatpush1.msra.mxu0 0.0
    %388 = vmatprep.subr.mxu0 0.0
    %389 = vmatpush1.msra.mxu0 0.0
    %390 = vmatprep.subr.mxu0 0.0
    %391 = vmatpush1.msra.mxu0 0.0
    %392 = vmatprep.subr.mxu0 0.0
    %393 = vmatpush1.msra.mxu0 0.0
    %394 = vmatprep.subr.mxu0 0.0
    %395 = vmatpush1.msra.mxu0 0.0
    %396 = vmatprep.subr.mxu0 0.0
    %397 = vmatpush1.msra.mxu0 0.0
    %398 = vmatprep.subr.mxu0 0.0
    %399 = vmatpush1.msra.mxu0 0.0
    %400 = vmatprep.subr.mxu0 0.0
    %401 = vmatpush1.msra.mxu0 0.0
    %402 = vmatprep.subr.mxu0 0.0
    %403 = vmatpush1.msra.mxu0 0.0
    %404 = vmatprep.subr.mxu0 0.0
    %405 = vmatpush1.msra.mxu0 0.0
    %406 = vmatprep.subr.mxu0 0.0
    %407 = vmatpush1.msra.mxu0 0.0
    %408 = vmatprep.subr.mxu0 0.0
    %409 = vmatpush1.msra.mxu0 0.0
    %410 = vmatprep.subr.mxu0 0.0
    %411 = vmatpush1.msra.mxu0 0.0
    %412 = vmatprep.subr.mxu0 0.0
    %413 = vmatpush1.msra.mxu0 0.0
    %414 = vmatprep.subr.mxu0 0.0
    %415 = vmatpush1.msra.mxu0 0.0
    %416 = vmatprep.subr.mxu0 0.0
    %417 = vmatpush1.msra.mxu0 0.0
    %418 = vmatprep.subr.mxu0 0.0
    %419 = vmatpush1.msra.mxu0 0.0
    %420 = vmatprep.subr.mxu0 0.0
    %421 = vmatpush1.msra.mxu0 0.0
    %422 = vmatprep.subr.mxu0 0.0
    %423 = vmatpush1.msra.mxu0 0.0
    %424 = vmatprep.subr.mxu0 0.0
    %425 = vmatpush1.msra.mxu0 0.0
    %426 = vmatprep.subr.mxu0 0.0
    %427 = vmatpush1.msra.mxu0 0.0
    %428 = vmatprep.subr.mxu0 0.0
    %429 = vmatpush1.msra.mxu0 0.0
    %430 = vmatprep.subr.mxu0 0.0
    %431 = vmatpush1.msra.mxu0 0.0
    %432 = vmatprep.subr.mxu0 0.0
    %433 = vmatpush1.msra.mxu0 0.0
    %434 = vmatprep.subr.mxu0 0.0
    %435 = vmatpush1.msra.mxu0 0.0
    %436 = vmatprep.mubr.f32.mxu0 0.0
    %437 = vmatmul.mubr.f32.gmra.mrb[0].mxu0 %v370
    %v438 = vpop.f32.mrb[0].mxu0
    %v439 = vadd.f32 0.0, %v438
    %v440 = vpop.f32.mrb[0].mxu0
    %441 = vdwg.mxu0
    %v443 = vrot.slane %v439, 4
    %v445 = vadd.f32 %v134, %v443
    %v446 = vxor.u32 %v445, 2147483648
    %v447 = vmul.f32 %v446, 1.442695
    %v448 = vpow.pop %v447
    %v449 = vadd.f32 %v448, 1.0
    %v450 = vrcp.pop %v449
    %v451 = vmul.f32 1.0, %v450
    %v452 = vadd.f32 %v439, %v228
    %v454 = vrot.slane %v452, 4
    %455 = vrot.lane.b32.xlu0 %v454, 96
    %v456 = vpop.permute.xlu0 %455
    %v458 = vmul.f32 %v451, %v456
    %460 = vrot.lane.b32.xlu0 %v458, 32
    %v461 = vpop.permute.xlu0 %460
    %v463 = vadd.f32 %v134, %v461
    %v464 = vtanh.pop %v463
    %v466 = vrot.slane %v464, 2
    %v468 = vsub.f32 %v365, %v466
    %v470 = vrot.slane %v468, 6
    %471 = vrot.lane.b32.xlu0 %v470, 112
    %v472 = vpop.permute.xlu0 %471
    %v474 = vmul.f32 %v451, %v472
    %476 = vrot.lane.b32.xlu0 %v474, 16
    %v477 = vpop.permute.xlu0 %476
    %v479 = vadd.f32 %v464, %v477
    %v481 = vrot.slane %v479, 4
    %482 = vrot.lane.b32.xlu0 %v481, 96
    %v483 = vpop.permute.xlu0 %482
    %v484 = vsel %vm60, %v483, 0
    %486 = vmatprep.subr.mxu0 0.0
    %487 = vmatpush1.msra.mxu0 %v41
    %488 = vmatprep.subr.mxu0 0.0
    %489 = vmatpush1.msra.mxu0 %v42
    %490 = vmatprep.subr.mxu0 0.0
    %491 = vmatpush1.msra.mxu0 0.0
    %492 = vmatprep.subr.mxu0 0.0
    %493 = vmatpush1.msra.mxu0 0.0
    %494 = vmatprep.subr.mxu0 0.0
    %495 = vmatpush1.msra.mxu0 0.0
    %496 = vmatprep.subr.mxu0 0.0
    %497 = vmatpush1.msra.mxu0 0.0
    %498 = vmatprep.subr.mxu0 0.0
    %499 = vmatpush1.msra.mxu0 0.0
    %500 = vmatprep.subr.mxu0 0.0
    %501 = vmatpush1.msra.mxu0 0.0
    %502 = vmatprep.subr.mxu0 0.0
    %503 = vmatpush1.msra.mxu0 0.0
    %504 = vmatprep.subr.mxu0 0.0
    %505 = vmatpush1.msra.mxu0 0.0
    %506 = vmatprep.subr.mxu0 0.0
    %507 = vmatpush1.msra.mxu0 0.0
    %508 = vmatprep.subr.mxu0 0.0
    %509 = vmatpush1.msra.mxu0 0.0
    %510 = vmatprep.subr.mxu0 0.0
    %511 = vmatpush1.msra.mxu0 0.0
    %512 = vmatprep.subr.mxu0 0.0
    %513 = vmatpush1.msra.mxu0 0.0
    %514 = vmatprep.subr.mxu0 0.0
    %515 = vmatpush1.msra.mxu0 0.0
    %516 = vmatprep.subr.mxu0 0.0
    %517 = vmatpush1.msra.mxu0 0.0
    %518 = vmatprep.subr.mxu0 0.0
    %519 = vmatpush1.msra.mxu0 0.0
    %520 = vmatprep.subr.mxu0 0.0
    %521 = vmatpush1.msra.mxu0 0.0
    %522 = vmatprep.subr.mxu0 0.0
    %523 = vmatpush1.msra.mxu0 0.0
    %524 = vmatprep.subr.mxu0 0.0
    %525 = vmatpush1.msra.mxu0 0.0
    %526 = vmatprep.subr.mxu0 0.0
    %527 = vmatpush1.msra.mxu0 0.0
    %528 = vmatprep.subr.mxu0 0.0
    %529 = vmatpush1.msra.mxu0 0.0
    %530 = vmatprep.subr.mxu0 0.0
    %531 = vmatpush1.msra.mxu0 0.0
    %532 = vmatprep.subr.mxu0 0.0
    %533 = vmatpush1.msra.mxu0 0.0
    %534 = vmatprep.subr.mxu0 0.0
    %535 = vmatpush1.msra.mxu0 0.0
    %536 = vmatprep.subr.mxu0 0.0
    %537 = vmatpush1.msra.mxu0 0.0
    %538 = vmatprep.subr.mxu0 0.0
    %539 = vmatpush1.msra.mxu0 0.0
    %540 = vmatprep.subr.mxu0 0.0
    %541 = vmatpush1.msra.mxu0 0.0
    %542 = vmatprep.subr.mxu0 0.0
    %543 = vmatpush1.msra.mxu0 0.0
    %544 = vmatprep.subr.mxu0 0.0
    %545 = vmatpush1.msra.mxu0 0.0
    %546 = vmatprep.subr.mxu0 0.0
    %547 = vmatpush1.msra.mxu0 0.0
    %548 = vmatprep.subr.mxu0 0.0
    %549 = vmatpush1.msra.mxu0 0.0
    %550 = vmatprep.mubr.f32.mxu0 0.0
    %551 = vmatmul.mubr.f32.gmra.mrb[0].mxu0 %v484
    %v552 = vpop.f32.mrb[0].mxu0
    %v553 = vadd.f32 0.0, %v552
    %v554 = vpop.f32.mrb[0].mxu0
    %555 = vdwg.mxu0
    %v557 = vrot.slane %v553, 2
    %v559 = vadd.f32 %v134, %v557
    %v560 = vxor.u32 %v559, 2147483648
    %v561 = vmul.f32 %v560, 1.442695
    %v562 = vpow.pop %v561
    %v563 = vadd.f32 %v562, 1.0
    %v564 = vrcp.pop %v563
    %v565 = vmul.f32 1.0, %v564
    %v566 = vadd.f32 %v553, %v228
    %v568 = vrot.slane %v566, 2
    %569 = vrot.lane.b32.xlu0 %v568, 96
    %v570 = vpop.permute.xlu0 %569
    %v572 = vmul.f32 %v565, %v570
    %574 = vrot.lane.b32.xlu0 %v572, 32
    %v575 = vpop.permute.xlu0 %574
    %v577 = vadd.f32 %v134, %v575
    %v578 = vtanh.pop %v577
    %v580 = vrot.slane %v578, 2
    %v582 = vsub.f32 %v479, %v580
    %v584 = vrot.slane %v582, 6
    %585 = vrot.lane.b32.xlu0 %v584, 112
    %v586 = vpop.permute.xlu0 %585
    %v588 = vmul.f32 %v565, %v586
    %590 = vrot.lane.b32.xlu0 %v588, 16
    %v591 = vpop.permute.xlu0 %590
    %v593 = vadd.f32 %v578, %v591
    %v595 = vrot.slane %v593, 6
    %596 = vrot.lane.b32.xlu0 %v595, 96
    %v597 = vpop.permute.xlu0 %596
    %v598 = vsel %vm60, %v597, 0
    %600 = vmatprep.subr.mxu0 0.0
    %601 = vmatpush1.msra.mxu0 %v41
    %602 = vmatprep.subr.mxu0 0.0
    %603 = vmatpush1.msra.mxu0 %v42
    %604 = vmatprep.subr.mxu0 0.0
    %605 = vmatpush1.msra.mxu0 0.0
    %606 = vmatprep.subr.mxu0 0.0
    %607 = vmatpush1.msra.mxu0 0.0
    %608 = vmatprep.subr.mxu0 0.0
    %609 = vmatpush1.msra.mxu0 0.0
    %610 = vmatprep.subr.mxu0 0.0
    %611 = vmatpush1.msra.mxu0 0.0
    %612 = vmatprep.subr.mxu0 0.0
    %613 = vmatpush1.msra.mxu0 0.0
    %614 = vmatprep.subr.mxu0 0.0
    %615 = vmatpush1.msra.mxu0 0.0
    %616 = vmatprep.subr.mxu0 0.0
    %617 = vmatpush1.msra.mxu0 0.0
    %618 = vmatprep.subr.mxu0 0.0
    %619 = vmatpush1.msra.mxu0 0.0
    %620 = vmatprep.subr.mxu0 0.0
    %621 = vmatpush1.msra.mxu0 0.0
    %622 = vmatprep.subr.mxu0 0.0
    %623 = vmatpush1.msra.mxu0 0.0
    %624 = vmatprep.subr.mxu0 0.0
    %625 = vmatpush1.msra.mxu0 0.0
    %626 = vmatprep.subr.mxu0 0.0
    %627 = vmatpush1.msra.mxu0 0.0
    %628 = vmatprep.subr.mxu0 0.0
    %629 = vmatpush1.msra.mxu0 0.0
    %630 = vmatprep.subr.mxu0 0.0
    %631 = vmatpush1.msra.mxu0 0.0
    %632 = vmatprep.subr.mxu0 0.0
    %633 = vmatpush1.msra.mxu0 0.0
    %634 = vmatprep.subr.mxu0 0.0
    %635 = vmatpush1.msra.mxu0 0.0
    %636 = vmatprep.subr.mxu0 0.0
    %637 = vmatpush1.msra.mxu0 0.0
    %638 = vmatprep.subr.mxu0 0.0
    %639 = vmatpush1.msra.mxu0 0.0
    %640 = vmatprep.subr.mxu0 0.0
    %641 = vmatpush1.msra.mxu0 0.0
    %642 = vmatprep.subr.mxu0 0.0
    %643 = vmatpush1.msra.mxu0 0.0
    %644 = vmatprep.subr.mxu0 0.0
    %645 = vmatpush1.msra.mxu0 0.0
    %646 = vmatprep.subr.mxu0 0.0
    %647 = vmatpush1.msra.mxu0 0.0
    %648 = vmatprep.subr.mxu0 0.0
    %649 = vmatpush1.msra.mxu0 0.0
    %650 = vmatprep.subr.mxu0 0.0
    %651 = vmatpush1.msra.mxu0 0.0
    %652 = vmatprep.subr.mxu0 0.0
    %653 = vmatpush1.msra.mxu0 0.0
    %654 = vmatprep.subr.mxu0 0.0
    %655 = vmatpush1.msra.mxu0 0.0
    %656 = vmatprep.subr.mxu0 0.0
    %657 = vmatpush1.msra.mxu0 0.0
    %658 = vmatprep.subr.mxu0 0.0
    %659 = vmatpush1.msra.mxu0 0.0
    %660 = vmatprep.subr.mxu0 0.0
    %661 = vmatpush1.msra.mxu0 0.0
    %662 = vmatprep.subr.mxu0 0.0
    %663 = vmatpush1.msra.mxu0 0.0
    %664 = vmatprep.mubr.f32.mxu0 0.0
    %665 = vmatmul.mubr.f32.gmra.mrb[0].mxu0 %v598
    %v666 = vpop.f32.mrb[0].mxu0
    %v667 = vadd.f32 0.0, %v666
    %v668 = vpop.f32.mrb[0].mxu0
    %669 = vdwg.mxu0
    %v670 = vadd.f32 %v139, %v667
    %v671 = vxor.u32 %v670, 2147483648
    %v672 = vmul.f32 %v671, 1.442695
    %v673 = vpow.pop %v672
    %v674 = vadd.f32 %v673, 1.0
    %v675 = vrcp.pop %v674
    %v676 = vmul.f32 1.0, %v675
    %v677 = vadd.f32 %v667, %v228
    %679 = vrot.lane.b32.xlu0 %v677, 96
    %v680 = vpop.permute.xlu0 %679
    %v682 = vmul.f32 %v676, %v680
    %684 = vrot.lane.b32.xlu0 %v682, 32
    %v685 = vpop.permute.xlu0 %684
    %v687 = vadd.f32 %v139, %v685
    %v688 = vtanh.pop %v687
    %v690 = vrot.slane %v688, 2
    %v692 = vsub.f32 %v593, %v690
    %v694 = vrot.slane %v692, 6
    %695 = vrot.lane.b32.xlu0 %v694, 112
    %v696 = vpop.permute.xlu0 %695
    %v698 = vmul.f32 %v676, %v696
    %700 = vrot.lane.b32.xlu0 %v698, 16
    %v701 = vpop.permute.xlu0 %700
    %v703 = vadd.f32 %v688, %v701
    %704 = vmatprep.subr.mxu0 0.0
    %705 = vmatpush1.msra.mxu0 %v43
    %706 = vmatprep.subr.mxu0 0.0
    %707 = vmatpush1.msra.mxu0 %v44
    %708 = vmatprep.subr.mxu0 0.0
    %709 = vmatpush1.msra.mxu0 0.0
    %710 = vmatprep.subr.mxu0 0.0
    %711 = vmatpush1.msra.mxu0 0.0
    %712 = vmatprep.subr.mxu0 0.0
    %713 = vmatpush1.msra.mxu0 0.0
    %714 = vmatprep.subr.mxu0 0.0
    %715 = vmatpush1.msra.mxu0 0.0
    %716 = vmatprep.subr.mxu0 0.0
    %717 = vmatpush1.msra.mxu0 0.0
    %718 = vmatprep.subr.mxu0 0.0
    %719 = vmatpush1.msra.mxu0 0.0
    %720 = vmatprep.subr.mxu0 0.0
    %721 = vmatpush1.msra.mxu0 0.0
    %722 = vmatprep.subr.mxu0 0.0
    %723 = vmatpush1.msra.mxu0 0.0
    %724 = vmatprep.subr.mxu0 0.0
    %725 = vmatpush1.msra.mxu0 0.0
    %726 = vmatprep.subr.mxu0 0.0
    %727 = vmatpush1.msra.mxu0 0.0
    %728 = vmatprep.subr.mxu0 0.0
    %729 = vmatpush1.msra.mxu0 0.0
    %730 = vmatprep.subr.mxu0 0.0
    %731 = vmatpush1.msra.mxu0 0.0
    %732 = vmatprep.subr.mxu0 0.0
    %733 = vmatpush1.msra.mxu0 0.0
    %734 = vmatprep.subr.mxu0 0.0
    %735 = vmatpush1.msra.mxu0 0.0
    %736 = vmatprep.subr.mxu0 0.0
    %737 = vmatpush1.msra.mxu0 0.0
    %738 = vmatprep.subr.mxu0 0.0
    %739 = vmatpush1.msra.mxu0 0.0
    %740 = vmatprep.subr.mxu0 0.0
    %741 = vmatpush1.msra.mxu0 0.0
    %742 = vmatprep.subr.mxu0 0.0
    %743 = vmatpush1.msra.mxu0 0.0
    %744 = vmatprep.subr.mxu0 0.0
    %745 = vmatpush1.msra.mxu0 0.0
    %746 = vmatprep.subr.mxu0 0.0
    %747 = vmatpush1.msra.mxu0 0.0
    %748 = vmatprep.subr.mxu0 0.0
    %749 = vmatpush1.msra.mxu0 0.0
    %750 = vmatprep.subr.mxu0 0.0
    %751 = vmatpush1.msra.mxu0 0.0
    %752 = vmatprep.subr.mxu0 0.0
    %753 = vmatpush1.msra.mxu0 0.0
    %754 = vmatprep.subr.mxu0 0.0
    %755 = vmatpush1.msra.mxu0 0.0
    %756 = vmatprep.subr.mxu0 0.0
    %757 = vmatpush1.msra.mxu0 0.0
    %758 = vmatprep.subr.mxu0 0.0
    %759 = vmatpush1.msra.mxu0 0.0
    %760 = vmatprep.subr.mxu0 0.0
    %761 = vmatpush1.msra.mxu0 0.0
    %762 = vmatprep.subr.mxu0 0.0
    %763 = vmatpush1.msra.mxu0 0.0
    %764 = vmatprep.subr.mxu0 0.0
    %765 = vmatpush1.msra.mxu0 0.0
    %766 = vmatprep.subr.mxu0 0.0
    %767 = vmatpush1.msra.mxu0 0.0
    %768 = vmatprep.mubr.f32.mxu0 0.0
    %769 = vmatmul.mubr.f32.gmra.mrb[0].mxu0 %v143
    %v770 = vpop.f32.mrb[0].mxu0
    %v771 = vadd.f32 0.0, %v770
    %v772 = vpop.f32.mrb[0].mxu0
    %773 = vdwg.mxu0
    %v775 = vrot.slane %v771, 2
    %776 = vrot.lane.b32.xlu0 %v775, 48
    %v777 = vpop.permute.xlu0 %776
    %v779 = vadd.f32 %v139, %v777
    %v780 = vxor.u32 %v779, 2147483648
    %v781 = vmul.f32 %v780, 1.442695
    %v782 = vpow.pop %v781
    %v783 = vadd.f32 %v782, 1.0
    %v784 = vrcp.pop %v783
    %v785 = vmul.f32 1.0, %v784
    %786 = vrot.lane.b32.xlu0 %v225, 16
    %v787 = vpop.permute.xlu0 %786
    %v789 = vadd.f32 %v771, %v787
    %v791 = vrot.slane %v789, 2
    %792 = vrot.lane.b32.xlu0 %v791, 16
    %v793 = vpop.permute.xlu0 %792
    %v795 = vmul.f32 %v785, %v793
    %797 = vrot.lane.b32.xlu0 %v795, 32
    %v798 = vpop.permute.xlu0 %797
    %v800 = vadd.f32 %v139, %v798
    %v801 = vtanh.pop %v800
    %v802 = vsub.f32 0.0, %v801
    %804 = vrot.lane.b32.xlu0 %v802, 112
    %v805 = vpop.permute.xlu0 %804
    %v807 = vmul.f32 %v785, %v805
    %809 = vrot.lane.b32.xlu0 %v807, 16
    %v810 = vpop.permute.xlu0 %809
    %v812 = vadd.f32 %v801, %v810
    %v814 = vrot.slane %v812, 6
    %815 = vrot.lane.b32.xlu0 %v814, 48
    %v816 = vpop.permute.xlu0 %815
    %v817 = vsel %vm60, %v816, 0
    %819 = vmatprep.subr.mxu0 0.0
    %820 = vmatpush1.msra.mxu0 %v43
    %821 = vmatprep.subr.mxu0 0.0
    %822 = vmatpush1.msra.mxu0 %v44
    %823 = vmatprep.subr.mxu0 0.0
    %824 = vmatpush1.msra.mxu0 0.0
    %825 = vmatprep.subr.mxu0 0.0
    %826 = vmatpush1.msra.mxu0 0.0
    %827 = vmatprep.subr.mxu0 0.0
    %828 = vmatpush1.msra.mxu0 0.0
    %829 = vmatprep.subr.mxu0 0.0
    %830 = vmatpush1.msra.mxu0 0.0
    %831 = vmatprep.subr.mxu0 0.0
    %832 = vmatpush1.msra.mxu0 0.0
    %833 = vmatprep.subr.mxu0 0.0
    %834 = vmatpush1.msra.mxu0 0.0
    %835 = vmatprep.subr.mxu0 0.0
    %836 = vmatpush1.msra.mxu0 0.0
    %837 = vmatprep.subr.mxu0 0.0
    %838 = vmatpush1.msra.mxu0 0.0
    %839 = vmatprep.subr.mxu0 0.0
    %840 = vmatpush1.msra.mxu0 0.0
    %841 = vmatprep.subr.mxu0 0.0
    %842 = vmatpush1.msra.mxu0 0.0
    %843 = vmatprep.subr.mxu0 0.0
    %844 = vmatpush1.msra.mxu0 0.0
    %845 = vmatprep.subr.mxu0 0.0
    %846 = vmatpush1.msra.mxu0 0.0
    %847 = vmatprep.subr.mxu0 0.0
    %848 = vmatpush1.msra.mxu0 0.0
    %849 = vmatprep.subr.mxu0 0.0
    %850 = vmatpush1.msra.mxu0 0.0
    %851 = vmatprep.subr.mxu0 0.0
    %852 = vmatpush1.msra.mxu0 0.0
    %853 = vmatprep.subr.mxu0 0.0
    %854 = vmatpush1.msra.mxu0 0.0
    %855 = vmatprep.subr.mxu0 0.0
    %856 = vmatpush1.msra.mxu0 0.0
    %857 = vmatprep.subr.mxu0 0.0
    %858 = vmatpush1.msra.mxu0 0.0
    %859 = vmatprep.subr.mxu0 0.0
    %860 = vmatpush1.msra.mxu0 0.0
    %861 = vmatprep.subr.mxu0 0.0
    %862 = vmatpush1.msra.mxu0 0.0
    %863 = vmatprep.subr.mxu0 0.0
    %864 = vmatpush1.msra.mxu0 0.0
    %865 = vmatprep.subr.mxu0 0.0
    %866 = vmatpush1.msra.mxu0 0.0
    %867 = vmatprep.subr.mxu0 0.0
    %868 = vmatpush1.msra.mxu0 0.0
    %869 = vmatprep.subr.mxu0 0.0
    %870 = vmatpush1.msra.mxu0 0.0
    %871 = vmatprep.subr.mxu0 0.0
    %872 = vmatpush1.msra.mxu0 0.0
    %873 = vmatprep.subr.mxu0 0.0
    %874 = vmatpush1.msra.mxu0 0.0
    %875 = vmatprep.subr.mxu0 0.0
    %876 = vmatpush1.msra.mxu0 0.0
    %877 = vmatprep.subr.mxu0 0.0
    %878 = vmatpush1.msra.mxu0 0.0
    %879 = vmatprep.subr.mxu0 0.0
    %880 = vmatpush1.msra.mxu0 0.0
    %881 = vmatprep.subr.mxu0 0.0
    %882 = vmatpush1.msra.mxu0 0.0
    %883 = vmatprep.mubr.f32.mxu0 0.0
    %884 = vmatmul.mubr.f32.gmra.mrb[0].mxu0 %v817
    %v885 = vpop.f32.mrb[0].mxu0
    %v886 = vadd.f32 0.0, %v885
    %v887 = vpop.f32.mrb[0].mxu0
    %888 = vdwg.mxu0
    %v890 = vrot.slane %v886, 4
    %891 = vrot.lane.b32.xlu0 %v890, 48
    %v892 = vpop.permute.xlu0 %891
    %v894 = vadd.f32 %v139, %v892
    %v895 = vxor.u32 %v894, 2147483648
    %v896 = vmul.f32 %v895, 1.442695
    %v897 = vpow.pop %v896
    %v898 = vadd.f32 %v897, 1.0
    %v899 = vrcp.pop %v898
    %v900 = vmul.f32 1.0, %v899
    %v901 = vadd.f32 %v886, %v787
    %v903 = vrot.slane %v901, 4
    %904 = vrot.lane.b32.xlu0 %v903, 16
    %v905 = vpop.permute.xlu0 %904
    %v907 = vmul.f32 %v900, %v905
    %909 = vrot.lane.b32.xlu0 %v907, 32
    %v910 = vpop.permute.xlu0 %909
    %v912 = vadd.f32 %v139, %v910
    %v913 = vtanh.pop %v912
    %v915 = vrot.slane %v913, 6
    %v917 = vsub.f32 %v812, %v915
    %v919 = vrot.slane %v917, 2
    %920 = vrot.lane.b32.xlu0 %v919, 112
    %v921 = vpop.permute.xlu0 %920
    %v923 = vmul.f32 %v900, %v921
    %925 = vrot.lane.b32.xlu0 %v923, 16
    %v926 = vpop.permute.xlu0 %925
    %v928 = vadd.f32 %v913, %v926
    %v930 = vrot.slane %v928, 4
    %931 = vrot.lane.b32.xlu0 %v930, 48
    %v932 = vpop.permute.xlu0 %931
    %v933 = vsel %vm60, %v932, 0
    %935 = vmatprep.subr.mxu0 0.0
    %936 = vmatpush1.msra.mxu0 %v43
    %937 = vmatprep.subr.mxu0 0.0
    %938 = vmatpush1.msra.mxu0 %v44
    %939 = vmatprep.subr.mxu0 0.0
    %940 = vmatpush1.msra.mxu0 0.0
    %941 = vmatprep.subr.mxu0 0.0
    %942 = vmatpush1.msra.mxu0 0.0
    %943 = vmatprep.subr.mxu0 0.0
    %944 = vmatpush1.msra.mxu0 0.0
    %945 = vmatprep.subr.mxu0 0.0
    %946 = vmatpush1.msra.mxu0 0.0
    %947 = vmatprep.subr.mxu0 0.0
    %948 = vmatpush1.msra.mxu0 0.0
    %949 = vmatprep.subr.mxu0 0.0
    %950 = vmatpush1.msra.mxu0 0.0
    %951 = vmatprep.subr.mxu0 0.0
    %952 = vmatpush1.msra.mxu0 0.0
    %953 = vmatprep.subr.mxu0 0.0
    %954 = vmatpush1.msra.mxu0 0.0
    %955 = vmatprep.subr.mxu0 0.0
    %956 = vmatpush1.msra.mxu0 0.0
    %957 = vmatprep.subr.mxu0 0.0
    %958 = vmatpush1.msra.mxu0 0.0
    %959 = vmatprep.subr.mxu0 0.0
    %960 = vmatpush1.msra.mxu0 0.0
    %961 = vmatprep.subr.mxu0 0.0
    %962 = vmatpush1.msra.mxu0 0.0
    %963 = vmatprep.subr.mxu0 0.0
    %964 = vmatpush1.msra.mxu0 0.0
    %965 = vmatprep.subr.mxu0 0.0
    %966 = vmatpush1.msra.mxu0 0.0
    %967 = vmatprep.subr.mxu0 0.0
    %968 = vmatpush1.msra.mxu0 0.0
    %969 = vmatprep.subr.mxu0 0.0
    %970 = vmatpush1.msra.mxu0 0.0
    %971 = vmatprep.subr.mxu0 0.0
    %972 = vmatpush1.msra.mxu0 0.0
    %973 = vmatprep.subr.mxu0 0.0
    %974 = vmatpush1.msra.mxu0 0.0
    %975 = vmatprep.subr.mxu0 0.0
    %976 = vmatpush1.msra.mxu0 0.0
    %977 = vmatprep.subr.mxu0 0.0
    %978 = vmatpush1.msra.mxu0 0.0
    %979 = vmatprep.subr.mxu0 0.0
    %980 = vmatpush1.msra.mxu0 0.0
    %981 = vmatprep.subr.mxu0 0.0
    %982 = vmatpush1.msra.mxu0 0.0
    %983 = vmatprep.subr.mxu0 0.0
    %984 = vmatpush1.msra.mxu0 0.0
    %985 = vmatprep.subr.mxu0 0.0
    %986 = vmatpush1.msra.mxu0 0.0
    %987 = vmatprep.subr.mxu0 0.0
    %988 = vmatpush1.msra.mxu0 0.0
    %989 = vmatprep.subr.mxu0 0.0
    %990 = vmatpush1.msra.mxu0 0.0
    %991 = vmatprep.subr.mxu0 0.0
    %992 = vmatpush1.msra.mxu0 0.0
    %993 = vmatprep.subr.mxu0 0.0
    %994 = vmatpush1.msra.mxu0 0.0
    %995 = vmatprep.subr.mxu0 0.0
    %996 = vmatpush1.msra.mxu0 0.0
    %997 = vmatprep.subr.mxu0 0.0
    %998 = vmatpush1.msra.mxu0 0.0
    %999 = vmatprep.mubr.f32.mxu0 0.0
    %1000 = vmatmul.mubr.f32.gmra.mrb[0].mxu0 %v933
    %v1001 = vpop.f32.mrb[0].mxu0
    %v1002 = vadd.f32 0.0, %v1001
    %v1003 = vpop.f32.mrb[0].mxu0
    %1004 = vdwg.mxu0
    %v1006 = vrot.slane %v1002, 6
    %1007 = vrot.lane.b32.xlu0 %v1006, 48
    %v1008 = vpop.permute.xlu0 %1007
    %v1010 = vadd.f32 %v139, %v1008
    %v1011 = vxor.u32 %v1010, 2147483648
    %v1012 = vmul.f32 %v1011, 1.442695
    %v1013 = vpow.pop %v1012
    %v1014 = vadd.f32 %v1013, 1.0
    %v1015 = vrcp.pop %v1014
    %v1016 = vmul.f32 1.0, %v1015
    %v1017 = vadd.f32 %v1002, %v787
    %v1019 = vrot.slane %v1017, 6
    %1020 = vrot.lane.b32.xlu0 %v1019, 16
    %v1021 = vpop.permute.xlu0 %1020
    %v1023 = vmul.f32 %v1016, %v1021
    %1025 = vrot.lane.b32.xlu0 %v1023, 32
    %v1026 = vpop.permute.xlu0 %1025
    %v1028 = vadd.f32 %v139, %v1026
    %v1029 = vtanh.pop %v1028
    %v1031 = vrot.slane %v1029, 6
    %v1033 = vsub.f32 %v928, %v1031
    %v1035 = vrot.slane %v1033, 2
    %1036 = vrot.lane.b32.xlu0 %v1035, 112
    %v1037 = vpop.permute.xlu0 %1036
    %v1039 = vmul.f32 %v1016, %v1037
    %1041 = vrot.lane.b32.xlu0 %v1039, 16
    %v1042 = vpop.permute.xlu0 %1041
    %v1044 = vadd.f32 %v1029, %v1042
    %v1046 = vrot.slane %v1044, 2
    %1047 = vrot.lane.b32.xlu0 %v1046, 48
    %v1048 = vpop.permute.xlu0 %1047
    %v1049 = vsel %vm60, %v1048, 0
    %1051 = vmatprep.subr.mxu0 0.0
    %1052 = vmatpush1.msra.mxu0 %v43
    %1053 = vmatprep.subr.mxu0 0.0
    %1054 = vmatpush1.msra.mxu0 %v44
    %1055 = vmatprep.subr.mxu0 0.0
    %1056 = vmatpush1.msra.mxu0 0.0
    %1057 = vmatprep.subr.mxu0 0.0
    %1058 = vmatpush1.msra.mxu0 0.0
    %1059 = vmatprep.subr.mxu0 0.0
    %1060 = vmatpush1.msra.mxu0 0.0
    %1061 = vmatprep.subr.mxu0 0.0
    %1062 = vmatpush1.msra.mxu0 0.0
    %1063 = vmatprep.subr.mxu0 0.0
    %1064 = vmatpush1.msra.mxu0 0.0
    %1065 = vmatprep.subr.mxu0 0.0
    %1066 = vmatpush1.msra.mxu0 0.0
    %1067 = vmatprep.subr.mxu0 0.0
    %1068 = vmatpush1.msra.mxu0 0.0
    %1069 = vmatprep.subr.mxu0 0.0
    %1070 = vmatpush1.msra.mxu0 0.0
    %1071 = vmatprep.subr.mxu0 0.0
    %1072 = vmatpush1.msra.mxu0 0.0
    %1073 = vmatprep.subr.mxu0 0.0
    %1074 = vmatpush1.msra.mxu0 0.0
    %1075 = vmatprep.subr.mxu0 0.0
    %1076 = vmatpush1.msra.mxu0 0.0
    %1077 = vmatprep.subr.mxu0 0.0
    %1078 = vmatpush1.msra.mxu0 0.0
    %1079 = vmatprep.subr.mxu0 0.0
    %1080 = vmatpush1.msra.mxu0 0.0
    %1081 = vmatprep.subr.mxu0 0.0
    %1082 = vmatpush1.msra.mxu0 0.0
    %1083 = vmatprep.subr.mxu0 0.0
    %1084 = vmatpush1.msra.mxu0 0.0
    %1085 = vmatprep.subr.mxu0 0.0
    %1086 = vmatpush1.msra.mxu0 0.0
    %1087 = vmatprep.subr.mxu0 0.0
    %1088 = vmatpush1.msra.mxu0 0.0
    %1089 = vmatprep.subr.mxu0 0.0
    %1090 = vmatpush1.msra.mxu0 0.0
    %1091 = vmatprep.subr.mxu0 0.0
    %1092 = vmatpush1.msra.mxu0 0.0
    %1093 = vmatprep.subr.mxu0 0.0
    %1094 = vmatpush1.msra.mxu0 0.0
    %1095 = vmatprep.subr.mxu0 0.0
    %1096 = vmatpush1.msra.mxu0 0.0
    %1097 = vmatprep.subr.mxu0 0.0
    %1098 = vmatpush1.msra.mxu0 0.0
    %1099 = vmatprep.subr.mxu0 0.0
    %1100 = vmatpush1.msra.mxu0 0.0
    %1101 = vmatprep.subr.mxu0 0.0
    %1102 = vmatpush1.msra.mxu0 0.0
    %1103 = vmatprep.subr.mxu0 0.0
    %1104 = vmatpush1.msra.mxu0 0.0
    %1105 = vmatprep.subr.mxu0 0.0
    %1106 = vmatpush1.msra.mxu0 0.0
    %1107 = vmatprep.subr.mxu0 0.0
    %1108 = vmatpush1.msra.mxu0 0.0
    %1109 = vmatprep.subr.mxu0 0.0
    %1110 = vmatpush1.msra.mxu0 0.0
    %1111 = vmatprep.subr.mxu0 0.0
    %1112 = vmatpush1.msra.mxu0 0.0
    %1113 = vmatprep.subr.mxu0 0.0
    %1114 = vmatpush1.msra.mxu0 0.0
    %1115 = vmatprep.mubr.f32.mxu0 0.0
    %1116 = vmatmul.mubr.f32.gmra.mrb[0].mxu0 %v1049
    %v1117 = vpop.f32.mrb[0].mxu0
    %v1118 = vadd.f32 0.0, %v1117
    %v1119 = vpop.f32.mrb[0].mxu0
    %1120 = vdwg.mxu0
    %1122 = vrot.lane.b32.xlu0 %v1118, 48
    %v1123 = vpop.permute.xlu0 %1122
    %v1125 = vadd.f32 %v139, %v1123
    %v1126 = vxor.u32 %v1125, 2147483648
    %v1127 = vmul.f32 %v1126, 1.442695
    %v1128 = vpow.pop %v1127
    %v1129 = vadd.f32 %v1128, 1.0
    %v1130 = vrcp.pop %v1129
    %v1131 = vmul.f32 1.0, %v1130
    %v1132 = vadd.f32 %v1118, %v787
    %1134 = vrot.lane.b32.xlu0 %v1132, 16
    %v1135 = vpop.permute.xlu0 %1134
    %v1137 = vmul.f32 %v1131, %v1135
    %1139 = vrot.lane.b32.xlu0 %v1137, 32
    %v1140 = vpop.permute.xlu0 %1139
    %v1142 = vadd.f32 %v139, %v1140
    %v1143 = vtanh.pop %v1142
    %v1145 = vrot.slane %v1143, 6
    %v1147 = vsub.f32 %v1044, %v1145
    %v1149 = vrot.slane %v1147, 2
    %1150 = vrot.lane.b32.xlu0 %v1149, 112
    %v1151 = vpop.permute.xlu0 %1150
    %v1153 = vmul.f32 %v1131, %v1151
    %1155 = vrot.lane.b32.xlu0 %v1153, 16
    %v1156 = vpop.permute.xlu0 %1155
    %v1158 = vadd.f32 %v1143, %v1156
    %1160 = vrot.lane.b32.xlu0 %v703, 96
    %v1161 = vpop.permute.xlu0 %1160
    %1164 = vrot.lane.b32.xlu0 %v1158, 64
    %v1165 = vpop.permute.xlu0 %1164
    %v1167 = vsel %vm60, %v1161, %v1165
    %v1168 = vlaneseq
    %v1169 = vshrl.u32 %v1168, 7
    %v1170 = vsub.s32 1, %v1169
    %v1171 = vrot.slane %v40, %v1170
    %vm1172 = vcmask 261120
    %v1174 = vsel %vm1172, %v1167, 0
    %1176 = vmatprep.subr.mxu0 0.0
    %1177 = vmatpush1.msra.mxu0 %v36
    %1178 = vmatprep.subr.mxu0 0.0
    %1179 = vmatpush1.msra.mxu0 %v37
    %1180 = vmatprep.subr.mxu0 0.0
    %1181 = vmatpush1.msra.mxu0 %v38
    %1182 = vmatprep.subr.mxu0 0.0
    %1183 = vmatpush1.msra.mxu0 %v39
    %1184 = vmatprep.subr.mxu0 0.0
    %1185 = vmatpush1.msra.mxu0 0.0
    %1186 = vmatprep.subr.mxu0 0.0
    %1187 = vmatpush1.msra.mxu0 0.0
    %1188 = vmatprep.subr.mxu0 0.0
    %1189 = vmatpush1.msra.mxu0 0.0
    %1190 = vmatprep.subr.mxu0 0.0
    %1191 = vmatpush1.msra.mxu0 0.0
    %1192 = vmatprep.subr.mxu0 0.0
    %1193 = vmatpush1.msra.mxu0 0.0
    %1194 = vmatprep.subr.mxu0 0.0
    %1195 = vmatpush1.msra.mxu0 0.0
    %1196 = vmatprep.subr.mxu0 0.0
    %1197 = vmatpush1.msra.mxu0 0.0
    %1198 = vmatprep.subr.mxu0 0.0
    %1199 = vmatpush1.msra.mxu0 0.0
    %1200 = vmatprep.subr.mxu0 0.0
    %1201 = vmatpush1.msra.mxu0 0.0
    %1202 = vmatprep.subr.mxu0 0.0
    %1203 = vmatpush1.msra.mxu0 0.0
    %1204 = vmatprep.subr.mxu0 0.0
    %1205 = vmatpush1.msra.mxu0 0.0
    %1206 = vmatprep.subr.mxu0 0.0
    %1207 = vmatpush1.msra.mxu0 0.0
    %1208 = vmatprep.subr.mxu0 0.0
    %1209 = vmatpush1.msra.mxu0 0.0
    %1210 = vmatprep.subr.mxu0 0.0
    %1211 = vmatpush1.msra.mxu0 0.0
    %1212 = vmatprep.subr.mxu0 0.0
    %1213 = vmatpush1.msra.mxu0 0.0
    %1214 = vmatprep.subr.mxu0 0.0
    %1215 = vmatpush1.msra.mxu0 0.0
    %1216 = vmatprep.subr.mxu0 0.0
    %1217 = vmatpush1.msra.mxu0 0.0
    %1218 = vmatprep.subr.mxu0 0.0
    %1219 = vmatpush1.msra.mxu0 0.0
    %1220 = vmatprep.subr.mxu0 0.0
    %1221 = vmatpush1.msra.mxu0 0.0
    %1222 = vmatprep.subr.mxu0 0.0
    %1223 = vmatpush1.msra.mxu0 0.0
    %1224 = vmatprep.subr.mxu0 0.0
    %1225 = vmatpush1.msra.mxu0 0.0
    %1226 = vmatprep.subr.mxu0 0.0
    %1227 = vmatpush1.msra.mxu0 0.0
    %1228 = vmatprep.subr.mxu0 0.0
    %1229 = vmatpush1.msra.mxu0 0.0
    %1230 = vmatprep.subr.mxu0 0.0
    %1231 = vmatpush1.msra.mxu0 0.0
    %1232 = vmatprep.subr.mxu0 0.0
    %1233 = vmatpush1.msra.mxu0 0.0
    %1234 = vmatprep.subr.mxu0 0.0
    %1235 = vmatpush1.msra.mxu0 0.0
    %1236 = vmatprep.subr.mxu0 0.0
    %1237 = vmatpush1.msra.mxu0 0.0
    %1238 = vmatprep.subr.mxu0 0.0
    %1239 = vmatpush1.msra.mxu0 0.0
    %1240 = vmatprep.mubr.f32.mxu0 0.0
    %1241 = vmatmul.mubr.f32.gmra.mrb[0].mxu0 %v1174
    %v1242 = vpop.f32.mrb[0].mxu0
    %v1243 = vadd.f32 %v1171, %v1242
    %v1244 = vpop.f32.mrb[0].mxu0
    %1245 = vdwg.mxu0
    %1246 = vmatprep.subr.mxu0 0.0
    %1247 = vmatpush1.msra.mxu0 %v45
    %1248 = vmatprep.subr.mxu0 0.0
    %1249 = vmatpush1.msra.mxu0 %v46
    %1250 = vmatprep.subr.mxu0 0.0
    %1251 = vmatpush1.msra.mxu0 0.0
    %1252 = vmatprep.subr.mxu0 0.0
    %1253 = vmatpush1.msra.mxu0 0.0
    %1254 = vmatprep.subr.mxu0 0.0
    %1255 = vmatpush1.msra.mxu0 0.0
    %1256 = vmatprep.subr.mxu0 0.0
    %1257 = vmatpush1.msra.mxu0 0.0
    %1258 = vmatprep.subr.mxu0 0.0
    %1259 = vmatpush1.msra.mxu0 0.0
    %1260 = vmatprep.subr.mxu0 0.0
    %1261 = vmatpush1.msra.mxu0 0.0
    %1262 = vmatprep.subr.mxu0 0.0
    %1263 = vmatpush1.msra.mxu0 0.0
    %1264 = vmatprep.subr.mxu0 0.0
    %1265 = vmatpush1.msra.mxu0 0.0
    %1266 = vmatprep.subr.mxu0 0.0
    %1267 = vmatpush1.msra.mxu0 0.0
    %1268 = vmatprep.subr.mxu0 0.0
    %1269 = vmatpush1.msra.mxu0 0.0
    %1270 = vmatprep.subr.mxu0 0.0
    %1271 = vmatpush1.msra.mxu0 0.0
    %1272 = vmatprep.subr.mxu0 0.0
    %1273 = vmatpush1.msra.mxu0 0.0
    %1274 = vmatprep.subr.mxu0 0.0
    %1275 = vmatpush1.msra.mxu0 0.0
    %1276 = vmatprep.subr.mxu0 0.0
    %1277 = vmatpush1.msra.mxu0 0.0
    %1278 = vmatprep.subr.mxu0 0.0
    %1279 = vmatpush1.msra.mxu0 0.0
    %1280 = vmatprep.subr.mxu0 0.0
    %1281 = vmatpush1.msra.mxu0 0.0
    %1282 = vmatprep.subr.mxu0 0.0
    %1283 = vmatpush1.msra.mxu0 0.0
    %1284 = vmatprep.subr.mxu0 0.0
    %1285 = vmatpush1.msra.mxu0 0.0
    %1286 = vmatprep.subr.mxu0 0.0
    %1287 = vmatpush1.msra.mxu0 0.0
    %1288 = vmatprep.subr.mxu0 0.0
    %1289 = vmatpush1.msra.mxu0 0.0
    %1290 = vmatprep.subr.mxu0 0.0
    %1291 = vmatpush1.msra.mxu0 0.0
    %1292 = vmatprep.subr.mxu0 0.0
    %1293 = vmatpush1.msra.mxu0 0.0
    %1294 = vmatprep.subr.mxu0 0.0
    %1295 = vmatpush1.msra.mxu0 0.0
    %1296 = vmatprep.subr.mxu0 0.0
    %1297 = vmatpush1.msra.mxu0 0.0
    %1298 = vmatprep.subr.mxu0 0.0
    %1299 = vmatpush1.msra.mxu0 0.0
    %1300 = vmatprep.subr.mxu0 0.0
    %1301 = vmatpush1.msra.mxu0 0.0
    %1302 = vmatprep.subr.mxu0 0.0
    %1303 = vmatpush1.msra.mxu0 0.0
    %1304 = vmatprep.subr.mxu0 0.0
    %1305 = vmatpush1.msra.mxu0 0.0
    %1306 = vmatprep.subr.mxu0 0.0
    %1307 = vmatpush1.msra.mxu0 0.0
    %1308 = vmatprep.subr.mxu0 0.0
    %1309 = vmatpush1.msra.mxu0 0.0
    %1310 = vmatprep.mubr.f32.mxu0 0.0
    %1311 = vmatmul.mubr.f32.gmra.mrb[0].mxu0 %v143
    %v1312 = vpop.f32.mrb[0].mxu0
    %v1313 = vadd.f32 0.0, %v1312
    %v1314 = vpop.f32.mrb[0].mxu0
    %1315 = vdwg.mxu0
    %v1316 = vadd.f32 %v1243, %v1313
    %v1317 = vxor.u32 %v1316, 2147483648
    %v1318 = vmul.f32 %v1317, 1.442695
    %v1319 = vpow.pop %v1318
    %v1320 = vadd.f32 %v1319, 1.0
    %v1321 = vrcp.pop %v1320
    %v1322 = vmul.f32 1.0, %v1321
    %v1324 = vrot.slane %v40, 2
    %v1326 = vadd.f32 %v1313, %v1324
    %1328 = vrot.lane.b32.xlu0 %v1326, 96
    %v1329 = vpop.permute.xlu0 %1328
    %v1331 = vmul.f32 %v1322, %v1329
    %1333 = vrot.lane.b32.xlu0 %v1331, 32
    %v1334 = vpop.permute.xlu0 %1333
    %v1336 = vadd.f32 %v1243, %v1334
    %v1337 = vtanh.pop %v1336
    %v1338 = vsub.f32 0.0, %v1337
    %1340 = vrot.lane.b32.xlu0 %v1338, 112
    %v1341 = vpop.permute.xlu0 %1340
    %v1343 = vmul.f32 %v1322, %v1341
    %1345 = vrot.lane.b32.xlu0 %v1343, 16
    %v1346 = vpop.permute.xlu0 %1345
    %v1348 = vadd.f32 %v1337, %v1346
    %1350 = vrot.lane.b32.xlu0 %v1348, 96
    %v1351 = vpop.permute.xlu0 %1350
    %v1352 = vsel %vm60, %v1351, 0
    %1354 = vmatprep.subr.mxu0 0.0
    %1355 = vmatpush1.msra.mxu0 %v45
    %1356 = vmatprep.subr.mxu0 0.0
    %1357 = vmatpush1.msra.mxu0 %v46
    %1358 = vmatprep.subr.mxu0 0.0
    %1359 = vmatpush1.msra.mxu0 0.0
    %1360 = vmatprep.subr.mxu0 0.0
    %1361 = vmatpush1.msra.mxu0 0.0
    %1362 = vmatprep.subr.mxu0 0.0
    %1363 = vmatpush1.msra.mxu0 0.0
    %1364 = vmatprep.subr.mxu0 0.0
    %1365 = vmatpush1.msra.mxu0 0.0
    %1366 = vmatprep.subr.mxu0 0.0
    %1367 = vmatpush1.msra.mxu0 0.0
    %1368 = vmatprep.subr.mxu0 0.0
    %1369 = vmatpush1.msra.mxu0 0.0
    %1370 = vmatprep.subr.mxu0 0.0
    %1371 = vmatpush1.msra.mxu0 0.0
    %1372 = vmatprep.subr.mxu0 0.0
    %1373 = vmatpush1.msra.mxu0 0.0
    %1374 = vmatprep.subr.mxu0 0.0
    %1375 = vmatpush1.msra.mxu0 0.0
    %1376 = vmatprep.subr.mxu0 0.0
    %1377 = vmatpush1.msra.mxu0 0.0
    %1378 = vmatprep.subr.mxu0 0.0
    %1379 = vmatpush1.msra.mxu0 0.0
    %1380 = vmatprep.subr.mxu0 0.0
    %1381 = vmatpush1.msra.mxu0 0.0
    %1382 = vmatprep.subr.mxu0 0.0
    %1383 = vmatpush1.msra.mxu0 0.0
    %1384 = vmatprep.subr.mxu0 0.0
    %1385 = vmatpush1.msra.mxu0 0.0
    %1386 = vmatprep.subr.mxu0 0.0
    %1387 = vmatpush1.msra.mxu0 0.0
    %1388 = vmatprep.subr.mxu0 0.0
    %1389 = vmatpush1.msra.mxu0 0.0
    %1390 = vmatprep.subr.mxu0 0.0
    %1391 = vmatpush1.msra.mxu0 0.0
    %1392 = vmatprep.subr.mxu0 0.0
    %1393 = vmatpush1.msra.mxu0 0.0
    %1394 = vmatprep.subr.mxu0 0.0
    %1395 = vmatpush1.msra.mxu0 0.0
    %1396 = vmatprep.subr.mxu0 0.0
    %1397 = vmatpush1.msra.mxu0 0.0
    %1398 = vmatprep.subr.mxu0 0.0
    %1399 = vmatpush1.msra.mxu0 0.0
    %1400 = vmatprep.subr.mxu0 0.0
    %1401 = vmatpush1.msra.mxu0 0.0
    %1402 = vmatprep.subr.mxu0 0.0
    %1403 = vmatpush1.msra.mxu0 0.0
    %1404 = vmatprep.subr.mxu0 0.0
    %1405 = vmatpush1.msra.mxu0 0.0
    %1406 = vmatprep.subr.mxu0 0.0
    %1407 = vmatpush1.msra.mxu0 0.0
    %1408 = vmatprep.subr.mxu0 0.0
    %1409 = vmatpush1.msra.mxu0 0.0
    %1410 = vmatprep.subr.mxu0 0.0
    %1411 = vmatpush1.msra.mxu0 0.0
    %1412 = vmatprep.subr.mxu0 0.0
    %1413 = vmatpush1.msra.mxu0 0.0
    %1414 = vmatprep.subr.mxu0 0.0
    %1415 = vmatpush1.msra.mxu0 0.0
    %1416 = vmatprep.subr.mxu0 0.0
    %1417 = vmatpush1.msra.mxu0 0.0
    %1418 = vmatprep.mubr.f32.mxu0 0.0
    %1419 = vmatmul.mubr.f32.gmra.mrb[0].mxu0 %v1352
    %v1420 = vpop.f32.mrb[0].mxu0
    %v1421 = vadd.f32 0.0, %v1420
    %v1422 = vpop.f32.mrb[0].mxu0
    %1423 = vdwg.mxu0
    %v1425 = vrot.slane %v1421, 7
    %v1427 = vadd.f32 %v1243, %v1425
    %v1428 = vxor.u32 %v1427, 2147483648
    %v1429 = vmul.f32 %v1428, 1.442695
    %v1430 = vpow.pop %v1429
    %v1431 = vadd.f32 %v1430, 1.0
    %v1432 = vrcp.pop %v1431
    %v1433 = vmul.f32 1.0, %v1432
    %v1434 = vadd.f32 %v1421, %v1324
    %v1436 = vrot.slane %v1434, 7
    %1437 = vrot.lane.b32.xlu0 %v1436, 96
    %v1438 = vpop.permute.xlu0 %1437
    %v1440 = vmul.f32 %v1433, %v1438
    %1442 = vrot.lane.b32.xlu0 %v1440, 32
    %v1443 = vpop.permute.xlu0 %1442
    %v1445 = vadd.f32 %v1243, %v1443
    %v1446 = vtanh.pop %v1445
    %v1448 = vrot.slane %v1446, 1
    %v1450 = vsub.f32 %v1348, %v1448
    %v1452 = vrot.slane %v1450, 7
    %1453 = vrot.lane.b32.xlu0 %v1452, 112
    %v1454 = vpop.permute.xlu0 %1453
    %v1456 = vmul.f32 %v1433, %v1454
    %1458 = vrot.lane.b32.xlu0 %v1456, 16
    %v1459 = vpop.permute.xlu0 %1458
    %v1461 = vadd.f32 %v1446, %v1459
    %1462 = vmatprep.subr.mxu0 0.0
    %1463 = vmatpush1.msra.mxu0 %v47
    %1464 = vmatprep.subr.mxu0 0.0
    %1465 = vmatpush1.msra.mxu0 %v48
    %1466 = vmatprep.subr.mxu0 0.0
    %1467 = vmatpush1.msra.mxu0 0.0
    %1468 = vmatprep.subr.mxu0 0.0
    %1469 = vmatpush1.msra.mxu0 0.0
    %1470 = vmatprep.subr.mxu0 0.0
    %1471 = vmatpush1.msra.mxu0 0.0
    %1472 = vmatprep.subr.mxu0 0.0
    %1473 = vmatpush1.msra.mxu0 0.0
    %1474 = vmatprep.subr.mxu0 0.0
    %1475 = vmatpush1.msra.mxu0 0.0
    %1476 = vmatprep.subr.mxu0 0.0
    %1477 = vmatpush1.msra.mxu0 0.0
    %1478 = vmatprep.subr.mxu0 0.0
    %1479 = vmatpush1.msra.mxu0 0.0
    %1480 = vmatprep.subr.mxu0 0.0
    %1481 = vmatpush1.msra.mxu0 0.0
    %1482 = vmatprep.subr.mxu0 0.0
    %1483 = vmatpush1.msra.mxu0 0.0
    %1484 = vmatprep.subr.mxu0 0.0
    %1485 = vmatpush1.msra.mxu0 0.0
    %1486 = vmatprep.subr.mxu0 0.0
    %1487 = vmatpush1.msra.mxu0 0.0
    %1488 = vmatprep.subr.mxu0 0.0
    %1489 = vmatpush1.msra.mxu0 0.0
    %1490 = vmatprep.subr.mxu0 0.0
    %1491 = vmatpush1.msra.mxu0 0.0
    %1492 = vmatprep.subr.mxu0 0.0
    %1493 = vmatpush1.msra.mxu0 0.0
    %1494 = vmatprep.subr.mxu0 0.0
    %1495 = vmatpush1.msra.mxu0 0.0
    %1496 = vmatprep.subr.mxu0 0.0
    %1497 = vmatpush1.msra.mxu0 0.0
    %1498 = vmatprep.subr.mxu0 0.0
    %1499 = vmatpush1.msra.mxu0 0.0
    %1500 = vmatprep.subr.mxu0 0.0
    %1501 = vmatpush1.msra.mxu0 0.0
    %1502 = vmatprep.subr.mxu0 0.0
    %1503 = vmatpush1.msra.mxu0 0.0
    %1504 = vmatprep.subr.mxu0 0.0
    %1505 = vmatpush1.msra.mxu0 0.0
    %1506 = vmatprep.subr.mxu0 0.0
    %1507 = vmatpush1.msra.mxu0 0.0
    %1508 = vmatprep.subr.mxu0 0.0
    %1509 = vmatpush1.msra.mxu0 0.0
    %1510 = vmatprep.subr.mxu0 0.0
    %1511 = vmatpush1.msra.mxu0 0.0
    %1512 = vmatprep.subr.mxu0 0.0
    %1513 = vmatpush1.msra.mxu0 0.0
    %1514 = vmatprep.subr.mxu0 0.0
    %1515 = vmatpush1.msra.mxu0 0.0
    %1516 = vmatprep.subr.mxu0 0.0
    %1517 = vmatpush1.msra.mxu0 0.0
    %1518 = vmatprep.subr.mxu0 0.0
    %1519 = vmatpush1.msra.mxu0 0.0
    %1520 = vmatprep.subr.mxu0 0.0
    %1521 = vmatpush1.msra.mxu0 0.0
    %1522 = vmatprep.subr.mxu0 0.0
    %1523 = vmatpush1.msra.mxu0 0.0
    %1524 = vmatprep.subr.mxu0 0.0
    %1525 = vmatpush1.msra.mxu0 0.0
    %1526 = vmatprep.mubr.f32.mxu0 0.0
    %1527 = vmatmul.mubr.f32.gmra.mrb[0].mxu0 %v143
    %v1528 = vpop.f32.mrb[0].mxu0
    %v1529 = vadd.f32 0.0, %v1528
    %v1530 = vpop.f32.mrb[0].mxu0
    %1531 = vdwg.mxu0
    %v1533 = vrot.slane %v1529, 7
    %1534 = vrot.lane.b32.xlu0 %v1533, 48
    %v1535 = vpop.permute.xlu0 %1534
    %v1537 = vadd.f32 %v1243, %v1535
    %v1538 = vxor.u32 %v1537, 2147483648
    %v1539 = vmul.f32 %v1538, 1.442695
    %v1540 = vpow.pop %v1539
    %v1541 = vadd.f32 %v1540, 1.0
    %v1542 = vrcp.pop %v1541
    %v1543 = vmul.f32 1.0, %v1542
    %1544 = vrot.lane.b32.xlu0 %v1324, 112
    %v1545 = vpop.permute.xlu0 %1544
    %v1547 = vadd.f32 %v1529, %v1545
    %v1549 = vrot.slane %v1547, 7
    %1550 = vrot.lane.b32.xlu0 %v1549, 16
    %v1551 = vpop.permute.xlu0 %1550
    %v1553 = vmul.f32 %v1543, %v1551
    %1555 = vrot.lane.b32.xlu0 %v1553, 32
    %v1556 = vpop.permute.xlu0 %1555
    %v1558 = vadd.f32 %v1243, %v1556
    %v1559 = vtanh.pop %v1558
    %v1560 = vsub.f32 0.0, %v1559
    %1562 = vrot.lane.b32.xlu0 %v1560, 112
    %v1563 = vpop.permute.xlu0 %1562
    %v1565 = vmul.f32 %v1543, %v1563
    %1567 = vrot.lane.b32.xlu0 %v1565, 16
    %v1568 = vpop.permute.xlu0 %1567
    %v1570 = vadd.f32 %v1559, %v1568
    %v1572 = vrot.slane %v1570, 1
    %1573 = vrot.lane.b32.xlu0 %v1572, 48
    %v1574 = vpop.permute.xlu0 %1573
    %v1575 = vsel %vm60, %v1574, 0
    %1577 = vmatprep.subr.mxu0 0.0
    %1578 = vmatpush1.msra.mxu0 %v47
    %1579 = vmatprep.subr.mxu0 0.0
    %1580 = vmatpush1.msra.mxu0 %v48
    %1581 = vmatprep.subr.mxu0 0.0
    %1582 = vmatpush1.msra.mxu0 0.0
    %1583 = vmatprep.subr.mxu0 0.0
    %1584 = vmatpush1.msra.mxu0 0.0
    %1585 = vmatprep.subr.mxu0 0.0
    %1586 = vmatpush1.msra.mxu0 0.0
    %1587 = vmatprep.subr.mxu0 0.0
    %1588 = vmatpush1.msra.mxu0 0.0
    %1589 = vmatprep.subr.mxu0 0.0
    %1590 = vmatpush1.msra.mxu0 0.0
    %1591 = vmatprep.subr.mxu0 0.0
    %1592 = vmatpush1.msra.mxu0 0.0
    %1593 = vmatprep.subr.mxu0 0.0
    %1594 = vmatpush1.msra.mxu0 0.0
    %1595 = vmatprep.subr.mxu0 0.0
    %1596 = vmatpush1.msra.mxu0 0.0
    %1597 = vmatprep.subr.mxu0 0.0
    %1598 = vmatpush1.msra.mxu0 0.0
    %1599 = vmatprep.subr.mxu0 0.0
    %1600 = vmatpush1.msra.mxu0 0.0
    %1601 = vmatprep.subr.mxu0 0.0
    %1602 = vmatpush1.msra.mxu0 0.0
    %1603 = vmatprep.subr.mxu0 0.0
    %1604 = vmatpush1.msra.mxu0 0.0
    %1605 = vmatprep.subr.mxu0 0.0
    %1606 = vmatpush1.msra.mxu0 0.0
    %1607 = vmatprep.subr.mxu0 0.0
    %1608 = vmatpush1.msra.mxu0 0.0
    %1609 = vmatprep.subr.mxu0 0.0
    %1610 = vmatpush1.msra.mxu0 0.0
    %1611 = vmatprep.subr.mxu0 0.0
    %1612 = vmatpush1.msra.mxu0 0.0
    %1613 = vmatprep.subr.mxu0 0.0
    %1614 = vmatpush1.msra.mxu0 0.0
    %1615 = vmatprep.subr.mxu0 0.0
    %1616 = vmatpush1.msra.mxu0 0.0
    %1617 = vmatprep.subr.mxu0 0.0
    %1618 = vmatpush1.msra.mxu0 0.0
    %1619 = vmatprep.subr.mxu0 0.0
    %1620 = vmatpush1.msra.mxu0 0.0
    %1621 = vmatprep.subr.mxu0 0.0
    %1622 = vmatpush1.msra.mxu0 0.0
    %1623 = vmatprep.subr.mxu0 0.0
    %1624 = vmatpush1.msra.mxu0 0.0
    %1625 = vmatprep.subr.mxu0 0.0
    %1626 = vmatpush1.msra.mxu0 0.0
    %1627 = vmatprep.subr.mxu0 0.0
    %1628 = vmatpush1.msra.mxu0 0.0
    %1629 = vmatprep.subr.mxu0 0.0
    %1630 = vmatpush1.msra.mxu0 0.0
    %1631 = vmatprep.subr.mxu0 0.0
    %1632 = vmatpush1.msra.mxu0 0.0
    %1633 = vmatprep.subr.mxu0 0.0
    %1634 = vmatpush1.msra.mxu0 0.0
    %1635 = vmatprep.subr.mxu0 0.0
    %1636 = vmatpush1.msra.mxu0 0.0
    %1637 = vmatprep.subr.mxu0 0.0
    %1638 = vmatpush1.msra.mxu0 0.0
    %1639 = vmatprep.subr.mxu0 0.0
    %1640 = vmatpush1.msra.mxu0 0.0
    %1641 = vmatprep.mubr.f32.mxu0 0.0
    %1642 = vmatmul.mubr.f32.gmra.mrb[0].mxu0 %v1575
    %v1643 = vpop.f32.mrb[0].mxu0
    %v1644 = vadd.f32 0.0, %v1643
    %v1645 = vpop.f32.mrb[0].mxu0
    %1646 = vdwg.mxu0
    %1648 = vrot.lane.b32.xlu0 %v1644, 48
    %v1649 = vpop.permute.xlu0 %1648
    %v1651 = vadd.f32 %v1243, %v1649
    %v1652 = vxor.u32 %v1651, 2147483648
    %v1653 = vmul.f32 %v1652, 1.442695
    %v1654 = vpow.pop %v1653
    %v1655 = vadd.f32 %v1654, 1.0
    %v1656 = vrcp.pop %v1655
    %v1657 = vmul.f32 1.0, %v1656
    %v1658 = vadd.f32 %v1644, %v1545
    %1660 = vrot.lane.b32.xlu0 %v1658, 16
    %v1661 = vpop.permute.xlu0 %1660
    %v1663 = vmul.f32 %v1657, %v1661
    %1665 = vrot.lane.b32.xlu0 %v1663, 32
    %v1666 = vpop.permute.xlu0 %1665
    %v1668 = vadd.f32 %v1243, %v1666
    %v1669 = vtanh.pop %v1668
    %v1671 = vrot.slane %v1669, 7
    %v1673 = vsub.f32 %v1570, %v1671
    %v1675 = vrot.slane %v1673, 1
    %1676 = vrot.lane.b32.xlu0 %v1675, 112
    %v1677 = vpop.permute.xlu0 %1676
    %v1679 = vmul.f32 %v1657, %v1677
    %1681 = vrot.lane.b32.xlu0 %v1679, 16
    %v1682 = vpop.permute.xlu0 %1681
    %v1684 = vadd.f32 %v1669, %v1682
    %vm1685 = vcmask 1040384
    %v1686 = vsel %vm1685, %v1348, %v1461
    %v1687 = vsel %vm1685, %v1684, %v1570
    %1689 = vrot.lane.b32.xlu0 %v1686, 96
    %v1690 = vpop.permute.xlu0 %1689
    %1693 = vrot.lane.b32.xlu0 %v1687, 64
    %v1694 = vpop.permute.xlu0 %1693
    %v1696 = vsel %vm60, %v1690, %v1694
    %v1697 = vlaneseq
    %v1698 = vshrl.u32 %v1697, 7
    %v1699 = vsub.s32 0, %v1698
    %v1700 = vrot.slane %v53, %v1699
    %v1702 = vsel %vm1172, %v1696, 0
    %1704 = vmatprep.subr.mxu0 0.0
    %1705 = vmatpush1.msra.mxu0 %v49
    %1706 = vmatprep.subr.mxu0 0.0
    %1707 = vmatpush1.msra.mxu0 %v50
    %1708 = vmatprep.subr.mxu0 0.0
    %1709 = vmatpush1.msra.mxu0 %v51
    %1710 = vmatprep.subr.mxu0 0.0
    %1711 = vmatpush1.msra.mxu0 %v52
    %1712 = vmatprep.subr.mxu0 0.0
    %1713 = vmatpush1.msra.mxu0 0.0
    %1714 = vmatprep.subr.mxu0 0.0
    %1715 = vmatpush1.msra.mxu0 0.0
    %1716 = vmatprep.subr.mxu0 0.0
    %1717 = vmatpush1.msra.mxu0 0.0
    %1718 = vmatprep.subr.mxu0 0.0
    %1719 = vmatpush1.msra.mxu0 0.0
    %1720 = vmatprep.subr.mxu0 0.0
    %1721 = vmatpush1.msra.mxu0 0.0
    %1722 = vmatprep.subr.mxu0 0.0
    %1723 = vmatpush1.msra.mxu0 0.0
    %1724 = vmatprep.subr.mxu0 0.0
    %1725 = vmatpush1.msra.mxu0 0.0
    %1726 = vmatprep.subr.mxu0 0.0
    %1727 = vmatpush1.msra.mxu0 0.0
    %1728 = vmatprep.subr.mxu0 0.0
    %1729 = vmatpush1.msra.mxu0 0.0
    %1730 = vmatprep.subr.mxu0 0.0
    %1731 = vmatpush1.msra.mxu0 0.0
    %1732 = vmatprep.subr.mxu0 0.0
    %1733 = vmatpush1.msra.mxu0 0.0
    %1734 = vmatprep.subr.mxu0 0.0
    %1735 = vmatpush1.msra.mxu0 0.0
    %1736 = vmatprep.subr.mxu0 0.0
    %1737 = vmatpush1.msra.mxu0 0.0
    %1738 = vmatprep.subr.mxu0 0.0
    %1739 = vmatpush1.msra.mxu0 0.0
    %1740 = vmatprep.subr.mxu0 0.0
    %1741 = vmatpush1.msra.mxu0 0.0
    %1742 = vmatprep.subr.mxu0 0.0
    %1743 = vmatpush1.msra.mxu0 0.0
    %1744 = vmatprep.subr.mxu0 0.0
    %1745 = vmatpush1.msra.mxu0 0.0
    %1746 = vmatprep.subr.mxu0 0.0
    %1747 = vmatpush1.msra.mxu0 0.0
    %1748 = vmatprep.subr.mxu0 0.0
    %1749 = vmatpush1.msra.mxu0 0.0
    %1750 = vmatprep.subr.mxu0 0.0
    %1751 = vmatpush1.msra.mxu0 0.0
    %1752 = vmatprep.subr.mxu0 0.0
    %1753 = vmatpush1.msra.mxu0 0.0
    %1754 = vmatprep.subr.mxu0 0.0
    %1755 = vmatpush1.msra.mxu0 0.0
    %1756 = vmatprep.subr.mxu0 0.0
    %1757 = vmatpush1.msra.mxu0 0.0
    %1758 = vmatprep.subr.mxu0 0.0
    %1759 = vmatpush1.msra.mxu0 0.0
    %1760 = vmatprep.subr.mxu0 0.0
    %1761 = vmatpush1.msra.mxu0 0.0
    %1762 = vmatprep.subr.mxu0 0.0
    %1763 = vmatpush1.msra.mxu0 0.0
    %1764 = vmatprep.subr.mxu0 0.0
    %1765 = vmatpush1.msra.mxu0 0.0
    %1766 = vmatprep.subr.mxu0 0.0
    %1767 = vmatpush1.msra.mxu0 0.0
    %1768 = vmatprep.mubr.f32.mxu0 0.0
    %1769 = vmatmul.mubr.f32.gmra.mrb[0].mxu0 %v1702
    %v1770 = vpop.f32.mrb[0].mxu0
    %v1771 = vadd.f32 %v1700, %v1770
    %v1772 = vpop.f32.mrb[0].mxu0
    %1773 = vdwg.mxu0
    %vm1774 = vcmask 33792
    %1775 = vst.msk [vmem:[#allocation5] sm:$0x3] %vm1774, %v1771
    %v1776 = vlaneseq
    %v1777 = vand.u32 %v1776, 127
    %vm1778 = vcmask 32768
    %v1779 = vsel %vm1778, %v1771, -inf
    %1780 = vmax.xlane.f32.xlu0 %v1779
    %v1781 = vpop.xlane.xlu0 %1780
    %v1782 = vsub.f32 %v1771, %v1781
    %v1783 = vmul.f32 %v1782, 1.442695
    %v1784 = vpow.pop %v1783
    %v1785 = vsel %vm1778, %v1784, 0.0
    %1786 = vadd.xlane.f32.xlu0 %v1785
    %v1787 = vpop.xlane.xlu0 %1786
    %v1788 = vlog2.pop %v1787
    %v1789 = vmul.f32 %v1788, 0.6931472
    %v1790 = vadd.f32 %v1789, %v1781
    %s1791 = sld [smem:[#allocation2]]
    %v1792 = vstv %s1791
    %vm1793 = vcmp.eq.s32.totalorder %v1777, %v1792
    %v1794 = vsel %vm1793, %v1771, 0.0
    %v1795 = vsel %vm1778, %v1794, 0.0
    %1796 = vadd.xlane.f32.xlu0 %v1795
    %v1797 = vpop.xlane.xlu0 %1796
    %v1798 = vsub.f32 %v1790, %v1797
    %v1799 = vadd.f32 %v1798, 0.0
    %vm1800 = vcmask 33793
    %v1801 = vsel %vm1800, %v1771, -inf
    %1802 = vmax.xlane.f32.xlu0 %v1801
    %v1803 = vpop.xlane.xlu0 %1802
    %v1804 = vsub.f32 %v1771, %v1803
    %v1805 = vmul.f32 %v1804, 1.442695
    %v1806 = vpow.pop %v1805
    %v1807 = vsel %vm1800, %v1806, 0.0
    %1808 = vadd.xlane.f32.xlu0 %v1807
    %v1809 = vpop.xlane.xlu0 %1808
    %v1810 = vlog2.pop %v1809
    %v1811 = vmul.f32 %v1810, 0.6931472
    %v1812 = vadd.f32 %v1811, %v1803
    %s1813 = sld [smem:[#allocation2 + $0x1]]
    %v1814 = vstv %s1813
    %vm1815 = vcmp.eq.s32.totalorder %v1777, %v1814
    %v1816 = vsel %vm1815, %v1771, 0.0
    %v1817 = vsel %vm1800, %v1816, 0.0
    %1818 = vadd.xlane.f32.xlu0 %v1817
    %v1819 = vpop.xlane.xlu0 %1818
    %v1820 = vsub.f32 %v1812, %v1819
    %v1822 = vrot.slane %v1820, 1
    %v1824 = vadd.f32 %v1799, %v1822
    %v1825 = vmul.f32 %v1824, 0.5
    %vm1826 = vcmask 0
    %1827 = vst.msk [vmem:[#allocation6] sm:$0x1] %vm1826, %v1825
    // Predicated region
    $region22: #{mr_dakgnn_forward.1} parent=1 // pred_check
      _
    $region23: #{mr_dakgnn_forward.1} parent=1 // pred_check_branch
      %1829 = sbr.rel (0) target = $region25
    $region24: #{mr_dakgnn_forward.1} parent=1 // pred_region
      %s1831 = ssub.s32 32, 32
      %1832 = vsyncadd [#allocation3], %s1831
      %s1834 = sshll.u32 [#allocation5], 4
      %s1835 = int_to_ptr.vmem [resolvable:$true] %s1834
      %1837 = dma.vmem_to_hbm [thread:$0]  %s1835, 32, %s4, [#allocation3]
    $region25: #{mr_dakgnn_forward.1} parent=1 // pred_fallthru
      _
    // Predicated region
    $region26: #{mr_dakgnn_forward.1} parent=1 // pred_check
      _
    $region27: #{mr_dakgnn_forward.1} parent=1 // pred_check_branch
      %1839 = sbr.rel (0) target = $region29
    $region28: #{mr_dakgnn_forward.1} parent=1 // pred_region
      %s1841 = ssub.s32 16, 16
      %1842 = vsyncadd [#allocation7], %s1841
      %s1844 = sshll.u32 [#allocation6], 4
      %s1845 = int_to_ptr.vmem [resolvable:$true] %s1844
      %1847 = dma.vmem_to_hbm [thread:$0]  %s1845, 16, %s5, [#allocation7]
    $region29: #{mr_dakgnn_forward.1} parent=1 // pred_fallthru
      _
    // Predicated region
    $region30: #{mr_dakgnn_forward.1} parent=1 // pred_check
      _
    $region31: #{mr_dakgnn_forward.1} parent=1 // pred_check_branch
      %1849 = sbr.rel (0) target = $region33
    $region32: #{mr_dakgnn_forward.1} parent=1 // pred_region
      %1850 = dma.done [#allocation3], 32
    $region33: #{mr_dakgnn_forward.1} parent=1 // pred_fallthru
      _
    // Predicated region
    $region34: #{mr_dakgnn_forward.1} parent=1 // pred_check
      _
    $region35: #{mr_dakgnn_forward.1} parent=1 // pred_check_branch
      %1852 = sbr.rel (0) target = $region37
    $region36: #{mr_dakgnn_forward.1} parent=1 // pred_region
      %1853 = dma.done [#allocation7], 16
    $region37: #{mr_dakgnn_forward.1} parent=1 // pred_fallthru
      _
    %1854 = vsyncpa [#allocation3], 1
    %1855 = vsyncpa [#allocation7], 1
    %1856 = vsyncpa [#allocation4], 1

</llo_original>
